<compile_context>
chip_gen: v5e
topology: v5e:2x2
jax: 0.10.0
libtpu: 0.0.40
codegen_flags: <defaults>
</compile_context>

<pallas_src>
import numpy as np
import jax
import jax.numpy as jnp
from jax.experimental import pallas as pl
from jax.experimental.pallas import tpu as pltpu


def _round_up(x, m):
    return ((x + m - 1) // m) * m


# ----------------------------------------------------------------------------
# Pallas kernel: whole forward pass for one batch tile (feature-major).
#   x_ref  : [128, tb]  bf16  concat([rna, meth, cnv]).T, zero-padded rows
#   w1_ref : [384, 128] bf16  block-diagonal fused subnet layer-1 (BN folded)
#   w2_ref : [192, 384] bf16  block-diagonal fused subnet layer-2 (BN folded)
#   w3_ref : [64, 192]  bf16  final Linear(192, 64), transposed
#   ow_ref : [64, 1]    f32   head Linear(64, 1) weight column
#   b1_ref : [384, 1]   f32   fused layer-1 bias
#   b2_ref : [192, 1]   f32   fused layer-2 bias
#   b3_ref : [64, 1]    f32   final Linear(192, 64) bias
#   ob_ref : [1, 1]     f32   head bias
#   out_ref: [1, tb]    f32   lane-dense risk scores for this batch tile
# ----------------------------------------------------------------------------
def survnet_kernel(x_ref, w1_ref, w2_ref, w3_ref, ow_ref,
                   b1_ref, b2_ref, b3_ref, ob_ref, out_ref):
    def mm(w_ref, a):
        # bf16 MXU operands, f32 accumulation.
        return jnp.dot(w_ref[...], a, preferred_element_type=jnp.float32)

    # Fused subnet layer 1: Linear(+folded BN) -> ReLU          [384, tb]
    h = jnp.maximum(mm(w1_ref, x_ref[...]) + b1_ref[...], 0.0)
    h = h.astype(jnp.bfloat16)
    # Fused subnet layer 2: Linear(+folded BN) -> ReLU          [192, tb]
    # (rows 0:64 = rna, 64:128 = meth, 128:192 = cnv == torch.cat([r,m,c],1))
    h = jnp.maximum(mm(w2_ref, h) + b2_ref[...], 0.0)
    h = h.astype(jnp.bfloat16)
    # final[0..1]: Linear(192, 64) -> ReLU                      [64, tb] f32
    h = jnp.maximum(mm(w3_ref, h) + b3_ref[...], 0.0)
    # final[2]: Linear(64, 1) as VPU multiply + sublane reduce  [1, tb]  f32
    out_ref[...] = jnp.sum(h * ow_ref[...], axis=0, keepdims=True) + ob_ref[...]


# ----------------------------------------------------------------------------
# Wrapper: one parallel grid axis over the (padded) batch lanes.
# ----------------------------------------------------------------------------
def multi_omics_survnet(rna, meth, cnv, packed, *, tb=None):
    B = rna.shape[0]
    D_pad = packed["w1t"].shape[1]                 # 128

    b128 = _round_up(max(B, 1), 128)
    if tb is None:
        if b128 <= 128:
            tb = 128                               # single tiny step
        else:
            # >=2 parallel steps (keeps both v7x TensorCores busy), capped at
            # 1024 rows/step to amortize the ~0.35us per-grid-step overhead.
            tb = min(1024, _round_up(b128 // 2, 128))
    else:
        tb = _round_up(tb, 128)
    B_pad = _round_up(B, tb)

    # Single fused packing pass: concat -> bf16 -> pad -> feature-major.
    x = jnp.concatenate([rna, meth, cnv], axis=1).astype(jnp.bfloat16)  # [B, D]
    D = x.shape[1]
    xt = jnp.pad(x, ((0, B_pad - B), (0, D_pad - D))).T                 # [128, B_pad]

    weights = (packed["w1t"], packed["w2t"], packed["w3t"], packed["ow"],
               packed["b1"], packed["b2"], packed["b3"], packed["ob"])

    def full_spec(a):
        return pl.BlockSpec(a.shape, lambda i, _nd=a.ndim: (0,) * _nd)

    out = pl.pallas_call(
        survnet_kernel,
        out_shape=jax.ShapeDtypeStruct((1, B_pad), jnp.float32),
        grid=(B_pad // tb,),
        in_specs=[pl.BlockSpec((D_pad, tb), lambda i: (0, i))]
                 + [full_spec(w) for w in weights],
        out_specs=pl.BlockSpec((1, tb), lambda i: (0, i)),
        compiler_params=pltpu.CompilerParams(
            dimension_semantics=("parallel",)),
    )(xt, *weights)

    return out[0, :B].reshape(B, 1)


# ----------------------------------------------------------------------------
# Deterministic parameter construction (PyTorch-style init, BN folded).
# ----------------------------------------------------------------------------
def _linear_init(key, d_in, d_out):
    k1, k2 = jax.random.split(key)
    bound = 1.0 / np.sqrt(d_in)
    w = jax.random.uniform(k1, (d_in, d_out), jnp.float32, -bound, bound)
    b = jax.random.uniform(k2, (d_out,), jnp.float32, -bound, bound)
    return w, b


def _bn_init(key, d):
    k1, k2, k3, k4 = jax.random.split(key, 4)
    gamma = 1.0 + 0.1 * jax.random.normal(k1, (d,), jnp.float32)
    beta = 0.1 * jax.random.normal(k2, (d,), jnp.float32)
    mean = 0.1 * jax.random.normal(k3, (d,), jnp.float32)
    var = jax.random.uniform(k4, (d,), jnp.float32, 0.5, 1.5)
    return gamma, beta, mean, var


def _fold_bn(w, b, gamma, beta, mean, var, eps=1e-5):
    s = gamma / jnp.sqrt(var + eps)
    return w * s[None, :], b * s + (beta - mean * s)


def make_raw_params(key, rna_dim, meth_dim, cnv_dim):
    keys = jax.random.split(key, 16)
    ki = iter(keys)

    def subnet_params(d_in):
        w1, b1 = _linear_init(next(ki), d_in, 128)
        w1, b1 = _fold_bn(w1, b1, *_bn_init(next(ki), 128))
        w2, b2 = _linear_init(next(ki), 128, 64)
        w2, b2 = _fold_bn(w2, b2, *_bn_init(next(ki), 64))
        return [w1, b1, w2, b2]

    params = []
    params += subnet_params(rna_dim)
    params += subnet_params(meth_dim)
    params += subnet_params(cnv_dim)

    wf, bf = _linear_init(next(ki), 192, 64)      # final[0]: Linear(192, 64)
    wo, bo = _linear_init(next(ki), 64, 1)        # final[2]: Linear(64, 1)
    params += [wf, bf, wo, bo]
    return params


def pack_params(raw, rna_dim, meth_dim, cnv_dim):
    (r_w1, r_b1, r_w2, r_b2,
     m_w1, m_b1, m_w2, m_b2,
     c_w1, c_b1, c_w2, c_b2,
     f_w, f_b, o_w, o_b) = raw

    D = rna_dim + meth_dim + cnv_dim
    D_pad = _round_up(D, 128)

    # Block-diagonal fused layer-1 weights, feature-major: [384, D_pad].
    w1t = jnp.zeros((384, D_pad), jnp.float32)
    w1t = w1t.at[0:128, 0:rna_dim].set(r_w1.T)
    w1t = w1t.at[128:256, rna_dim:rna_dim + meth_dim].set(m_w1.T)
    w1t = w1t.at[256:384, rna_dim + meth_dim:D].set(c_w1.T)

    # Block-diagonal fused layer-2 weights, feature-major: [192, 384].
    # Row order [0:64]=rna, [64:128]=meth, [128:192]=cnv == torch.cat order.
    w2t = jnp.zeros((192, 384), jnp.float32)
    w2t = w2t.at[0:64, 0:128].set(r_w2.T)
    w2t = w2t.at[64:128, 128:256].set(m_w2.T)
    w2t = w2t.at[128:192, 256:384].set(c_w2.T)

    w3t = f_w.T                                   # [64, 192]

    cast = lambda a: a.astype(jnp.bfloat16)
    col = lambda a: a.reshape(-1, 1).astype(jnp.float32)
    return dict(
        w1t=cast(w1t), w2t=cast(w2t), w3t=cast(w3t),
        ow=o_w.astype(jnp.float32),               # [64, 1]
        b1=col(jnp.concatenate([r_b1, m_b1, c_b1])),   # [384, 1]
        b2=col(jnp.concatenate([r_b2, m_b2, c_b2])),   # [192, 1]
        b3=col(f_b),                                   # [64, 1]
        ob=o_b.reshape(1, 1).astype(jnp.float32),      # [1, 1]
    )


# ----------------------------------------------------------------------------
# Pure-JAX reference of the same (folded, eval-mode) forward pass.
# matmul_dtype=bf16 mirrors the kernel's MXU operand precision; the head is
# f32 in both (the kernel computes it on the VPU in f32).
# ----------------------------------------------------------------------------
def ref_forward(rna, meth, cnv, raw, matmul_dtype=jnp.bfloat16):
    def dot(a, w):
        return jnp.dot(a.astype(matmul_dtype), w.astype(matmul_dtype),
                       preferred_element_type=jnp.float32)

    def sub(x, w1, b1, w2, b2):
        h = jnp.maximum(dot(x, w1) + b1, 0.0)
        return jnp.maximum(dot(h, w2) + b2, 0.0)

    r = sub(rna, *raw[0:4])
    m = sub(meth, *raw[4:8])
    c = sub(cnv, *raw[8:12])
    f_w, f_b, o_w, o_b = raw[12:16]
    h = jnp.maximum(dot(jnp.concatenate([r, m, c], axis=1), f_w) + f_b, 0.0)
    return jnp.dot(h, o_w) + o_b                   # head in f32


if __name__ == "__main__":
    B = 16
    rna_dim, meth_dim, cnv_dim = 32, 24, 16

    key = jax.random.PRNGKey(0)
    k_rna, k_meth, k_cnv, k_par = jax.random.split(key, 4)

    rna = jax.random.normal(k_rna, (B, rna_dim), jnp.float32)
    meth = jax.random.normal(k_meth, (B, meth_dim), jnp.float32)
    cnv = jax.random.normal(k_cnv, (B, cnv_dim), jnp.float32)

    raw = make_raw_params(k_par, rna_dim, meth_dim, cnv_dim)
    packed = pack_params(raw, rna_dim, meth_dim, cnv_dim)

    out = multi_omics_survnet(rna, meth, cnv, packed)
    out = jax.block_until_ready(out)
    assert out.shape == (B, 1), out.shape

    # Primary check: same math / same bf16 MXU-operand precision as the kernel.
    expected = ref_forward(rna, meth, cnv, raw, matmul_dtype=jnp.bfloat16)
    np.testing.assert_allclose(np.asarray(out), np.asarray(expected),
                               rtol=1e-2, atol=1e-2)

    # Sanity check vs. the pure-f32 eval-mode forward (loose: bf16 operands).
    golden = ref_forward(rna, meth, cnv, raw, matmul_dtype=jnp.float32)
    np.testing.assert_allclose(np.asarray(out), np.asarray(golden),
                               rtol=1e-1, atol=1e-1)
    print("KERNEL_OK")
</pallas_src>

<mosaic_0001>
module attributes {stable_mosaic.version = 11 : i64} {
  func.func @survnet_kernel(%arg0: i32, %arg1: memref<128x128xbf16, #tpu.memory_space<vmem>>, %arg2: memref<384x128xbf16, #tpu.memory_space<vmem>>, %arg3: memref<192x384xbf16, #tpu.memory_space<vmem>>, %arg4: memref<64x192xbf16, #tpu.memory_space<vmem>>, %arg5: memref<64x1xf32, #tpu.memory_space<vmem>>, %arg6: memref<384x1xf32, #tpu.memory_space<vmem>>, %arg7: memref<192x1xf32, #tpu.memory_space<vmem>>, %arg8: memref<64x1xf32, #tpu.memory_space<vmem>>, %arg9: memref<1x1xf32, #tpu.memory_space<vmem>>, %arg10: memref<1x128xf32, #tpu.memory_space<vmem>>) attributes {dimension_semantics = [#tpu.dimension_semantics<parallel>], iteration_bounds = array<i64: 1>, scalar_prefetch = 0 : i64, scratch_operands = 0 : i64, tpu.core_type = #tpu.core_type<tc>, window_params = [{transform_indices = @transform_0, window_bounds = array<i64: 128, 128>}, {pipeline_mode = #tpu.pipeline_mode<synchronous>, transform_indices = @transform_1, window_bounds = array<i64: 384, 128>}, {pipeline_mode = #tpu.pipeline_mode<synchronous>, transform_indices = @transform_2, window_bounds = array<i64: 192, 384>}, {pipeline_mode = #tpu.pipeline_mode<synchronous>, transform_indices = @transform_3, window_bounds = array<i64: 64, 192>}, {pipeline_mode = #tpu.pipeline_mode<synchronous>, transform_indices = @transform_4, window_bounds = array<i64: 64, 1>}, {pipeline_mode = #tpu.pipeline_mode<synchronous>, transform_indices = @transform_5, window_bounds = array<i64: 384, 1>}, {pipeline_mode = #tpu.pipeline_mode<synchronous>, transform_indices = @transform_6, window_bounds = array<i64: 192, 1>}, {pipeline_mode = #tpu.pipeline_mode<synchronous>, transform_indices = @transform_7, window_bounds = array<i64: 64, 1>}, {pipeline_mode = #tpu.pipeline_mode<synchronous>, transform_indices = @transform_8, window_bounds = array<i64: 1, 1>}, {transform_indices = @transform_9, window_bounds = array<i64: 1, 128>}]} {
    %c0 = arith.constant 0 : index
    %c0_0 = arith.constant 0 : index
    %0 = vector.load %arg1[%c0, %c0_0] : memref<128x128xbf16, #tpu.memory_space<vmem>>, vector<128x128xbf16>
    %c0_1 = arith.constant 0 : index
    %c0_2 = arith.constant 0 : index
    %1 = vector.load %arg2[%c0_1, %c0_2] : memref<384x128xbf16, #tpu.memory_space<vmem>>, vector<384x128xbf16>
    %cst = arith.constant dense<0.000000e+00> : vector<384x128xf32>
    %2 = tpu.matmul %1, %0, %cst {dimension_numbers = #tpu.dot_dimension_numbers<[1], [0], [0], [1], [0, 0, 1, 1], [], []>} : vector<384x128xbf16>, vector<128x128xbf16>, vector<384x128xf32> -> vector<384x128xf32>
    %c0_3 = arith.constant 0 : index
    %c0_4 = arith.constant 0 : index
    %3 = vector.load %arg6[%c0_3, %c0_4] : memref<384x1xf32, #tpu.memory_space<vmem>>, vector<384x1xf32>
    %4 = vector.broadcast %3 : vector<384x1xf32> to vector<384x128xf32>
    %5 = arith.addf %2, %4 : vector<384x128xf32>
    %cst_5 = arith.constant 0.000000e+00 : f32
    %6 = vector.broadcast %cst_5 : f32 to vector<384x128xf32>
    %7 = arith.maximumf %5, %6 : vector<384x128xf32>
    %8 = arith.truncf %7 : vector<384x128xf32> to vector<384x128xbf16>
    %c0_6 = arith.constant 0 : index
    %c0_7 = arith.constant 0 : index
    %9 = vector.load %arg3[%c0_6, %c0_7] : memref<192x384xbf16, #tpu.memory_space<vmem>>, vector<192x384xbf16>
    %cst_8 = arith.constant dense<0.000000e+00> : vector<192x128xf32>
    %10 = tpu.matmul %9, %8, %cst_8 {dimension_numbers = #tpu.dot_dimension_numbers<[1], [0], [0], [1], [0, 0, 1, 1], [], []>} : vector<192x384xbf16>, vector<384x128xbf16>, vector<192x128xf32> -> vector<192x128xf32>
    %c0_9 = arith.constant 0 : index
    %c0_10 = arith.constant 0 : index
    %11 = vector.load %arg7[%c0_9, %c0_10] : memref<192x1xf32, #tpu.memory_space<vmem>>, vector<192x1xf32>
    %12 = vector.broadcast %11 : vector<192x1xf32> to vector<192x128xf32>
    %13 = arith.addf %10, %12 : vector<192x128xf32>
    %cst_11 = arith.constant 0.000000e+00 : f32
    %14 = vector.broadcast %cst_11 : f32 to vector<192x128xf32>
    %15 = arith.maximumf %13, %14 : vector<192x128xf32>
    %16 = arith.truncf %15 : vector<192x128xf32> to vector<192x128xbf16>
    %c0_12 = arith.constant 0 : index
    %c0_13 = arith.constant 0 : index
    %17 = vector.load %arg4[%c0_12, %c0_13] : memref<64x192xbf16, #tpu.memory_space<vmem>>, vector<64x192xbf16>
    %cst_14 = arith.constant dense<0.000000e+00> : vector<64x128xf32>
    %18 = tpu.matmul %17, %16, %cst_14 {dimension_numbers = #tpu.dot_dimension_numbers<[1], [0], [0], [1], [0, 0, 1, 1], [], []>} : vector<64x192xbf16>, vector<192x128xbf16>, vector<64x128xf32> -> vector<64x128xf32>
    %c0_15 = arith.constant 0 : index
    %c0_16 = arith.constant 0 : index
    %19 = vector.load %arg8[%c0_15, %c0_16] : memref<64x1xf32, #tpu.memory_space<vmem>>, vector<64x1xf32>
    %20 = vector.broadcast %19 : vector<64x1xf32> to vector<64x128xf32>
    %21 = arith.addf %18, %20 : vector<64x128xf32>
    %cst_17 = arith.constant 0.000000e+00 : f32
    %22 = vector.broadcast %cst_17 : f32 to vector<64x128xf32>
    %23 = arith.maximumf %21, %22 : vector<64x128xf32>
    %c0_18 = arith.constant 0 : index
    %c0_19 = arith.constant 0 : index
    %24 = vector.load %arg5[%c0_18, %c0_19] : memref<64x1xf32, #tpu.memory_space<vmem>>, vector<64x1xf32>
    %25 = vector.broadcast %24 : vector<64x1xf32> to vector<64x128xf32>
    %26 = arith.mulf %23, %25 : vector<64x128xf32>
    %cst_20 = arith.constant dense<0.000000e+00> : vector<128xf32>
    %27 = vector.multi_reduction <add>, %26, %cst_20 [0] : vector<64x128xf32> to vector<128xf32>
    %28 = vector.shape_cast %27 : vector<128xf32> to vector<1x128xf32>
    %c0_21 = arith.constant 0 : index
    %c0_22 = arith.constant 0 : index
    %29 = vector.load %arg9[%c0_21, %c0_22] : memref<1x1xf32, #tpu.memory_space<vmem>>, vector<1x1xf32>
    %30 = vector.broadcast %29 : vector<1x1xf32> to vector<1x128xf32>
    %31 = arith.addf %28, %30 : vector<1x128xf32>
    %c0_23 = arith.constant 0 : index
    %c0_24 = arith.constant 0 : index
    %32 = vector.load %arg10[%c0_23, %c0_24] : memref<1x128xf32, #tpu.memory_space<vmem>>, vector<1x128xf32>
    tpu.vector_store %arg10[%c0_23, %c0_24], %31 {strides = array<i32>} : memref<1x128xf32, #tpu.memory_space<vmem>>, vector<1x128xf32>,
    return
  }
  func.func @transform_0(%arg0: i32) -> (i32, i32) {
    %c0_i32 = arith.constant 0 : i32
    %c0_i32_0 = arith.constant 0 : i32
    return %c0_i32, %arg0 : i32, i32
  }
  func.func @transform_1(%arg0: i32) -> (i32, i32) {
    %c0_i32 = arith.constant 0 : i32
    %c0_i32_0 = arith.constant 0 : i32
    %c0_i32_1 = arith.constant 0 : i32
    return %c0_i32, %c0_i32_0 : i32, i32
  }
  func.func @transform_2(%arg0: i32) -> (i32, i32) {
    %c0_i32 = arith.constant 0 : i32
    %c0_i32_0 = arith.constant 0 : i32
    %c0_i32_1 = arith.constant 0 : i32
    return %c0_i32, %c0_i32_0 : i32, i32
  }
  func.func @transform_3(%arg0: i32) -> (i32, i32) {
    %c0_i32 = arith.constant 0 : i32
    %c0_i32_0 = arith.constant 0 : i32
    %c0_i32_1 = arith.constant 0 : i32
    return %c0_i32, %c0_i32_0 : i32, i32
  }
  func.func @transform_4(%arg0: i32) -> (i32, i32) {
    %c0_i32 = arith.constant 0 : i32
    %c0_i32_0 = arith.constant 0 : i32
    %c0_i32_1 = arith.constant 0 : i32
    return %c0_i32, %c0_i32_0 : i32, i32
  }
  func.func @transform_5(%arg0: i32) -> (i32, i32) {
    %c0_i32 = arith.constant 0 : i32
    %c0_i32_0 = arith.constant 0 : i32
    %c0_i32_1 = arith.constant 0 : i32
    return %c0_i32, %c0_i32_0 : i32, i32
  }
  func.func @transform_6(%arg0: i32) -> (i32, i32) {
    %c0_i32 = arith.constant 0 : i32
    %c0_i32_0 = arith.constant 0 : i32
    %c0_i32_1 = arith.constant 0 : i32
    return %c0_i32, %c0_i32_0 : i32, i32
  }
  func.func @transform_7(%arg0: i32) -> (i32, i32) {
    %c0_i32 = arith.constant 0 : i32
    %c0_i32_0 = arith.constant 0 : i32
    %c0_i32_1 = arith.constant 0 : i32
    return %c0_i32, %c0_i32_0 : i32, i32
  }
  func.func @transform_8(%arg0: i32) -> (i32, i32) {
    %c0_i32 = arith.constant 0 : i32
    %c0_i32_0 = arith.constant 0 : i32
    %c0_i32_1 = arith.constant 0 : i32
    return %c0_i32, %c0_i32_0 : i32, i32
  }
  func.func @transform_9(%arg0: i32) -> (i32, i32) {
    %c0_i32 = arith.constant 0 : i32
    %c0_i32_0 = arith.constant 0 : i32
    return %c0_i32, %arg0 : i32, i32
  }
}

</mosaic_0001>

<llo_original>
// kernel: tpu_custom_call.1
$region0: #{tpu_custom_call.1}
  #allocation0 [shape = 'u32[]', space=smem, size = 0x4, offset = 0x4, fixed_abs, tag = 'smem constant byte address 0x4 - core index']
  #allocation1 [shape = 'u32[72,128]{1,0:T(1,128)}', space=vmem, size = 0x9000, scoped, tag = 'internal scratch']
  #allocation2 [shape = 'f32[1,1]{1,0:T(1,128)S(1)}', space=vmem, size = 0x200, scoped, tag = 'scoped memory for tpu_custom_call.1']
  %s0 = inlined_call_operand.vmem [shape: bf16[128,128], index: 0, kind: input, shape index: {}]
  %s1 = inlined_call_operand.vmem [shape: bf16[384,128], index: 1, kind: input, shape index: {}]
  %s2 = inlined_call_operand.vmem [shape: bf16[192,384], index: 2, kind: input, shape index: {}]
  %s3 = inlined_call_operand.vmem [shape: bf16[64,192], index: 3, kind: input, shape index: {}]
  %s4 = inlined_call_operand.vmem [shape: f32[64,1], index: 4, kind: input, shape index: {}]
  %s5 = inlined_call_operand.vmem [shape: f32[384,1], index: 5, kind: input, shape index: {}]
  %s6 = inlined_call_operand.vmem [shape: f32[192,1], index: 6, kind: input, shape index: {}]
  %s7 = inlined_call_operand.vmem [shape: f32[64,1], index: 7, kind: input, shape index: {}]
  %s8 = inlined_call_operand.<no memory space> [shape: f32[1,1], index: 8, kind: input, shape index: {}]
  %s9 = inlined_call_operand.hbm [shape: f32[1,128], index: 9, kind: output, shape index: {}]
  %s10 = sld [smem:[#allocation0]]
  $region46: #{tpu_custom_call.1} parent=0
    _
  %s12 = ssub.s32 1, %s10
  %s13 = scalar_select 0, %s12, %s10
  %v14 = vstv %s8
  %15 = vst [vmem:[#allocation2] sm:$0x1] %v14
  $region1: #{tpu_custom_call.1} parent=0
    #allocation3 [shape = 'u8[512]{0}', space=vmem, size = 0x400, scoped, tag = 'output window, operand 0, single buffered']
    #allocation4 [shape = 's32[1]{0}', space=sflag, size = 0x4, scoped, tag = 'scoped memory for tpu_custom_call.1']
    %16 = vsyncpa [#allocation4], 0
    // Predicated region
    $region2: #{tpu_custom_call.1} parent=1 // pred_check
      _
    $region3: #{tpu_custom_call.1} parent=1 // pred_check_branch
      %18 = sbr.rel (0) target = $region5
    $region4: #{tpu_custom_call.1} parent=1 // pred_region
      _
    $region5: #{tpu_custom_call.1} parent=1 // pred_fallthru
      _
    // Predicated region
    $region6: #{tpu_custom_call.1} parent=1 // pred_check
      _
    $region7: #{tpu_custom_call.1} parent=1 // pred_check_branch
      %20 = sbr.rel (0) target = $region9
    $region8: #{tpu_custom_call.1} parent=1 // pred_region
      _
    $region9: #{tpu_custom_call.1} parent=1 // pred_fallthru
      _
    // Predicated region
    $region10: #{tpu_custom_call.1} parent=1 // pred_check
      _
    $region11: #{tpu_custom_call.1} parent=1 // pred_check_branch
      %22 = sbr.rel (0) target = $region13
    $region12: #{tpu_custom_call.1} parent=1 // pred_region
      _
    $region13: #{tpu_custom_call.1} parent=1 // pred_fallthru
      _
    // Predicated region
    $region14: #{tpu_custom_call.1} parent=1 // pred_check
      _
    $region15: #{tpu_custom_call.1} parent=1 // pred_check_branch
      %24 = sbr.rel (0) target = $region17
    $region16: #{tpu_custom_call.1} parent=1 // pred_region
      _
    $region17: #{tpu_custom_call.1} parent=1 // pred_fallthru
      _
    // Predicated region
    $region18: #{tpu_custom_call.1} parent=1 // pred_check
      _
    $region19: #{tpu_custom_call.1} parent=1 // pred_check_branch
      %26 = sbr.rel (0) target = $region21
    $region20: #{tpu_custom_call.1} parent=1 // pred_region
      _
    $region21: #{tpu_custom_call.1} parent=1 // pred_fallthru
      _
    // Predicated region
    $region22: #{tpu_custom_call.1} parent=1 // pred_check
      _
    $region23: #{tpu_custom_call.1} parent=1 // pred_check_branch
      %28 = sbr.rel (0) target = $region25
    $region24: #{tpu_custom_call.1} parent=1 // pred_region
      _
    $region25: #{tpu_custom_call.1} parent=1 // pred_fallthru
      _
    // Predicated region
    $region26: #{tpu_custom_call.1} parent=1 // pred_check
      _
    $region27: #{tpu_custom_call.1} parent=1 // pred_check_branch
      %30 = sbr.rel (0) target = $region29
    $region28: #{tpu_custom_call.1} parent=1 // pred_region
      _
    $region29: #{tpu_custom_call.1} parent=1 // pred_fallthru
      _
    // Predicated region
    $region30: #{tpu_custom_call.1} parent=1 // pred_check
      _
    $region31: #{tpu_custom_call.1} parent=1 // pred_check_branch
      %32 = sbr.rel (0) target = $region33
    $region32: #{tpu_custom_call.1} parent=1 // pred_region
      _
    $region33: #{tpu_custom_call.1} parent=1 // pred_fallthru
      _
    // Predicated region
    $region34: #{tpu_custom_call.1} parent=1 // pred_check
      _
    $region35: #{tpu_custom_call.1} parent=1 // pred_check_branch
      %34 = sbr.rel (0) target = $region37
    $region36: #{tpu_custom_call.1} parent=1 // pred_region
      _
    $region37: #{tpu_custom_call.1} parent=1 // pred_fallthru
      _
    %v36 = vld [vmem:[%s0] sm:$0xf]
    %v37 = vld [vmem:[%s0 + $0x4] sm:$0xf]
    %v38 = vld [vmem:[%s0 + $0x8] sm:$0xf]
    %v39 = vld [vmem:[%s0 + $0xc] sm:$0xf]
    %v40 = vld [vmem:[%s0 + $0x10] sm:$0xf]
    %v41 = vld [vmem:[%s0 + $0x14] sm:$0xf]
    %v42 = vld [vmem:[%s0 + $0x18] sm:$0xf]
    %v43 = vld [vmem:[%s0 + $0x1c] sm:$0xf]
    %v44 = vld [vmem:[%s0 + $0x20] sm:$0xf]
    %v45 = vld [vmem:[%s0 + $0x24] sm:$0xf]
    %v46 = vld [vmem:[%s0 + $0x28] sm:$0xf]
    %v47 = vld [vmem:[%s0 + $0x2c] sm:$0xf]
    %v48 = vld [vmem:[%s0 + $0x30] sm:$0xf]
    %v49 = vld [vmem:[%s0 + $0x34] sm:$0xf]
    %v50 = vld [vmem:[%s0 + $0x38] sm:$0xf]
    %v51 = vld [vmem:[%s0 + $0x3c] sm:$0xf]
    %v52 = vld [vmem:[%s1] sm:$0xf]
    %v53 = vld [vmem:[%s1 + $0x4] sm:$0xf]
    %v54 = vld [vmem:[%s1 + $0x8] sm:$0xf]
    %v55 = vld [vmem:[%s1 + $0xc] sm:$0xf]
    %v56 = vld [vmem:[%s1 + $0x10] sm:$0xf]
    %v57 = vld [vmem:[%s1 + $0x14] sm:$0xf]
    %v58 = vld [vmem:[%s1 + $0x18] sm:$0xf]
    %v59 = vld [vmem:[%s1 + $0x1c] sm:$0xf]
    %v60 = vld [vmem:[%s1 + $0x20] sm:$0xf]
    %v61 = vld [vmem:[%s1 + $0x24] sm:$0xf]
    %v62 = vld [vmem:[%s1 + $0x28] sm:$0xf]
    %v63 = vld [vmem:[%s1 + $0x2c] sm:$0xf]
    %v64 = vld [vmem:[%s1 + $0x30] sm:$0xf]
    %v65 = vld [vmem:[%s1 + $0x34] sm:$0xf]
    %v66 = vld [vmem:[%s1 + $0x38] sm:$0xf]
    %v67 = vld [vmem:[%s1 + $0x3c] sm:$0xf]
    %v68 = vld [vmem:[%s1 + $0x40] sm:$0xf]
    %v69 = vld [vmem:[%s1 + $0x44] sm:$0xf]
    %v70 = vld [vmem:[%s1 + $0x48] sm:$0xf]
    %v71 = vld [vmem:[%s1 + $0x4c] sm:$0xf]
    %v72 = vld [vmem:[%s1 + $0x50] sm:$0xf]
    %v73 = vld [vmem:[%s1 + $0x54] sm:$0xf]
    %v74 = vld [vmem:[%s1 + $0x58] sm:$0xf]
    %v75 = vld [vmem:[%s1 + $0x5c] sm:$0xf]
    %v76 = vld [vmem:[%s1 + $0x60] sm:$0xf]
    %v77 = vld [vmem:[%s1 + $0x64] sm:$0xf]
    %v78 = vld [vmem:[%s1 + $0x68] sm:$0xf]
    %v79 = vld [vmem:[%s1 + $0x6c] sm:$0xf]
    %v80 = vld [vmem:[%s1 + $0x70] sm:$0xf]
    %v81 = vld [vmem:[%s1 + $0x74] sm:$0xf]
    %v82 = vld [vmem:[%s1 + $0x78] sm:$0xf]
    %v83 = vld [vmem:[%s1 + $0x7c] sm:$0xf]
    %v84 = vld [vmem:[%s1 + $0x80] sm:$0xf]
    %v85 = vld [vmem:[%s1 + $0x84] sm:$0xf]
    %v86 = vld [vmem:[%s1 + $0x88] sm:$0xf]
    %v87 = vld [vmem:[%s1 + $0x8c] sm:$0xf]
    %v88 = vld [vmem:[%s1 + $0x90] sm:$0xf]
    %v89 = vld [vmem:[%s1 + $0x94] sm:$0xf]
    %v90 = vld [vmem:[%s1 + $0x98] sm:$0xf]
    %v91 = vld [vmem:[%s1 + $0x9c] sm:$0xf]
    %v92 = vld [vmem:[%s1 + $0xa0] sm:$0xf]
    %v93 = vld [vmem:[%s1 + $0xa4] sm:$0xf]
    %v94 = vld [vmem:[%s1 + $0xa8] sm:$0xf]
    %v95 = vld [vmem:[%s1 + $0xac] sm:$0xf]
    %v96 = vld [vmem:[%s1 + $0xb0] sm:$0xf]
    %v97 = vld [vmem:[%s1 + $0xb4] sm:$0xf]
    %v98 = vld [vmem:[%s1 + $0xb8] sm:$0xf]
    %v99 = vld [vmem:[%s1 + $0xbc] sm:$0xf]
    %v100 = vld [vmem:[%s5] sm:$0xff]
    %v101 = vld [vmem:[%s5 + $0x8] sm:$0xff]
    %v102 = vld [vmem:[%s5 + $0x10] sm:$0xff]
    %v103 = vld [vmem:[%s5 + $0x18] sm:$0xff]
    %v104 = vld [vmem:[%s5 + $0x20] sm:$0xff]
    %v105 = vld [vmem:[%s5 + $0x28] sm:$0xff]
    %v106 = vld [vmem:[%s5 + $0x30] sm:$0xff]
    %v107 = vld [vmem:[%s5 + $0x38] sm:$0xff]
    %v108 = vld [vmem:[%s5 + $0x40] sm:$0xff]
    %v109 = vld [vmem:[%s5 + $0x48] sm:$0xff]
    %v110 = vld [vmem:[%s5 + $0x50] sm:$0xff]
    %v111 = vld [vmem:[%s5 + $0x58] sm:$0xff]
    %v112 = vld [vmem:[%s5 + $0x60] sm:$0xff]
    %v113 = vld [vmem:[%s5 + $0x68] sm:$0xff]
    %v114 = vld [vmem:[%s5 + $0x70] sm:$0xff]
    %v115 = vld [vmem:[%s5 + $0x78] sm:$0xff]
    %v116 = vld [vmem:[%s5 + $0x80] sm:$0xff]
    %v117 = vld [vmem:[%s5 + $0x88] sm:$0xff]
    %v118 = vld [vmem:[%s5 + $0x90] sm:$0xff]
    %v119 = vld [vmem:[%s5 + $0x98] sm:$0xff]
    %v120 = vld [vmem:[%s5 + $0xa0] sm:$0xff]
    %v121 = vld [vmem:[%s5 + $0xa8] sm:$0xff]
    %v122 = vld [vmem:[%s5 + $0xb0] sm:$0xff]
    %v123 = vld [vmem:[%s5 + $0xb8] sm:$0xff]
    %v124 = vld [vmem:[%s5 + $0xc0] sm:$0xff]
    %v125 = vld [vmem:[%s5 + $0xc8] sm:$0xff]
    %v126 = vld [vmem:[%s5 + $0xd0] sm:$0xff]
    %v127 = vld [vmem:[%s5 + $0xd8] sm:$0xff]
    %v128 = vld [vmem:[%s5 + $0xe0] sm:$0xff]
    %v129 = vld [vmem:[%s5 + $0xe8] sm:$0xff]
    %v130 = vld [vmem:[%s5 + $0xf0] sm:$0xff]
    %v131 = vld [vmem:[%s5 + $0xf8] sm:$0xff]
    %v132 = vld [vmem:[%s5 + $0x100] sm:$0xff]
    %v133 = vld [vmem:[%s5 + $0x108] sm:$0xff]
    %v134 = vld [vmem:[%s5 + $0x110] sm:$0xff]
    %v135 = vld [vmem:[%s5 + $0x118] sm:$0xff]
    %v136 = vld [vmem:[%s5 + $0x120] sm:$0xff]
    %v137 = vld [vmem:[%s5 + $0x128] sm:$0xff]
    %v138 = vld [vmem:[%s5 + $0x130] sm:$0xff]
    %v139 = vld [vmem:[%s5 + $0x138] sm:$0xff]
    %v140 = vld [vmem:[%s5 + $0x140] sm:$0xff]
    %v141 = vld [vmem:[%s5 + $0x148] sm:$0xff]
    %v142 = vld [vmem:[%s5 + $0x150] sm:$0xff]
    %v143 = vld [vmem:[%s5 + $0x158] sm:$0xff]
    %v144 = vld [vmem:[%s5 + $0x160] sm:$0xff]
    %v145 = vld [vmem:[%s5 + $0x168] sm:$0xff]
    %v146 = vld [vmem:[%s5 + $0x170] sm:$0xff]
    %v147 = vld [vmem:[%s5 + $0x178] sm:$0xff]
    %149 = vset.pattern.permute.xlu0 0
    %150 = vperm.xlu0 %149, %v100
    %v151 = vpop.permute.xlu0 %150
    %154 = vset.pattern.permute.xlu0 0
    %155 = vperm.xlu0 %154, %v101
    %v156 = vpop.permute.xlu0 %155
    %159 = vset.pattern.permute.xlu0 0
    %160 = vperm.xlu0 %159, %v102
    %v161 = vpop.permute.xlu0 %160
    %164 = vset.pattern.permute.xlu0 0
    %165 = vperm.xlu0 %164, %v103
    %v166 = vpop.permute.xlu0 %165
    %169 = vset.pattern.permute.xlu0 0
    %170 = vperm.xlu0 %169, %v104
    %v171 = vpop.permute.xlu0 %170
    %174 = vset.pattern.permute.xlu0 0
    %175 = vperm.xlu0 %174, %v105
    %v176 = vpop.permute.xlu0 %175
    %179 = vset.pattern.permute.xlu0 0
    %180 = vperm.xlu0 %179, %v106
    %v181 = vpop.permute.xlu0 %180
    %184 = vset.pattern.permute.xlu0 0
    %185 = vperm.xlu0 %184, %v107
    %v186 = vpop.permute.xlu0 %185
    %189 = vset.pattern.permute.xlu0 0
    %190 = vperm.xlu0 %189, %v108
    %v191 = vpop.permute.xlu0 %190
    %194 = vset.pattern.permute.xlu0 0
    %195 = vperm.xlu0 %194, %v109
    %v196 = vpop.permute.xlu0 %195
    %199 = vset.pattern.permute.xlu0 0
    %200 = vperm.xlu0 %199, %v110
    %v201 = vpop.permute.xlu0 %200
    %204 = vset.pattern.permute.xlu0 0
    %205 = vperm.xlu0 %204, %v111
    %v206 = vpop.permute.xlu0 %205
    %209 = vset.pattern.permute.xlu0 0
    %210 = vperm.xlu0 %209, %v112
    %v211 = vpop.permute.xlu0 %210
    %214 = vset.pattern.permute.xlu0 0
    %215 = vperm.xlu0 %214, %v113
    %v216 = vpop.permute.xlu0 %215
    %219 = vset.pattern.permute.xlu0 0
    %220 = vperm.xlu0 %219, %v114
    %v221 = vpop.permute.xlu0 %220
    %224 = vset.pattern.permute.xlu0 0
    %225 = vperm.xlu0 %224, %v115
    %v226 = vpop.permute.xlu0 %225
    %229 = vset.pattern.permute.xlu0 0
    %230 = vperm.xlu0 %229, %v116
    %v231 = vpop.permute.xlu0 %230
    %234 = vset.pattern.permute.xlu0 0
    %235 = vperm.xlu0 %234, %v117
    %v236 = vpop.permute.xlu0 %235
    %239 = vset.pattern.permute.xlu0 0
    %240 = vperm.xlu0 %239, %v118
    %v241 = vpop.permute.xlu0 %240
    %244 = vset.pattern.permute.xlu0 0
    %245 = vperm.xlu0 %244, %v119
    %v246 = vpop.permute.xlu0 %245
    %249 = vset.pattern.permute.xlu0 0
    %250 = vperm.xlu0 %249, %v120
    %v251 = vpop.permute.xlu0 %250
    %254 = vset.pattern.permute.xlu0 0
    %255 = vperm.xlu0 %254, %v121
    %v256 = vpop.permute.xlu0 %255
    %259 = vset.pattern.permute.xlu0 0
    %260 = vperm.xlu0 %259, %v122
    %v261 = vpop.permute.xlu0 %260
    %264 = vset.pattern.permute.xlu0 0
    %265 = vperm.xlu0 %264, %v123
    %v266 = vpop.permute.xlu0 %265
    %269 = vset.pattern.permute.xlu0 0
    %270 = vperm.xlu0 %269, %v124
    %v271 = vpop.permute.xlu0 %270
    %274 = vset.pattern.permute.xlu0 0
    %275 = vperm.xlu0 %274, %v125
    %v276 = vpop.permute.xlu0 %275
    %279 = vset.pattern.permute.xlu0 0
    %280 = vperm.xlu0 %279, %v126
    %v281 = vpop.permute.xlu0 %280
    %284 = vset.pattern.permute.xlu0 0
    %285 = vperm.xlu0 %284, %v127
    %v286 = vpop.permute.xlu0 %285
    %289 = vset.pattern.permute.xlu0 0
    %290 = vperm.xlu0 %289, %v128
    %v291 = vpop.permute.xlu0 %290
    %294 = vset.pattern.permute.xlu0 0
    %295 = vperm.xlu0 %294, %v129
    %v296 = vpop.permute.xlu0 %295
    %299 = vset.pattern.permute.xlu0 0
    %300 = vperm.xlu0 %299, %v130
    %v301 = vpop.permute.xlu0 %300
    %304 = vset.pattern.permute.xlu0 0
    %305 = vperm.xlu0 %304, %v131
    %v306 = vpop.permute.xlu0 %305
    %309 = vset.pattern.permute.xlu0 0
    %310 = vperm.xlu0 %309, %v132
    %v311 = vpop.permute.xlu0 %310
    %314 = vset.pattern.permute.xlu0 0
    %315 = vperm.xlu0 %314, %v133
    %v316 = vpop.permute.xlu0 %315
    %319 = vset.pattern.permute.xlu0 0
    %320 = vperm.xlu0 %319, %v134
    %v321 = vpop.permute.xlu0 %320
    %324 = vset.pattern.permute.xlu0 0
    %325 = vperm.xlu0 %324, %v135
    %v326 = vpop.permute.xlu0 %325
    %329 = vset.pattern.permute.xlu0 0
    %330 = vperm.xlu0 %329, %v136
    %v331 = vpop.permute.xlu0 %330
    %334 = vset.pattern.permute.xlu0 0
    %335 = vperm.xlu0 %334, %v137
    %v336 = vpop.permute.xlu0 %335
    %339 = vset.pattern.permute.xlu0 0
    %340 = vperm.xlu0 %339, %v138
    %v341 = vpop.permute.xlu0 %340
    %344 = vset.pattern.permute.xlu0 0
    %345 = vperm.xlu0 %344, %v139
    %v346 = vpop.permute.xlu0 %345
    %349 = vset.pattern.permute.xlu0 0
    %350 = vperm.xlu0 %349, %v140
    %v351 = vpop.permute.xlu0 %350
    %354 = vset.pattern.permute.xlu0 0
    %355 = vperm.xlu0 %354, %v141
    %v356 = vpop.permute.xlu0 %355
    %359 = vset.pattern.permute.xlu0 0
    %360 = vperm.xlu0 %359, %v142
    %v361 = vpop.permute.xlu0 %360
    %364 = vset.pattern.permute.xlu0 0
    %365 = vperm.xlu0 %364, %v143
    %v366 = vpop.permute.xlu0 %365
    %369 = vset.pattern.permute.xlu0 0
    %370 = vperm.xlu0 %369, %v144
    %v371 = vpop.permute.xlu0 %370
    %374 = vset.pattern.permute.xlu0 0
    %375 = vperm.xlu0 %374, %v145
    %v376 = vpop.permute.xlu0 %375
    %379 = vset.pattern.permute.xlu0 0
    %380 = vperm.xlu0 %379, %v146
    %v381 = vpop.permute.xlu0 %380
    %384 = vset.pattern.permute.xlu0 0
    %385 = vperm.xlu0 %384, %v147
    %v386 = vpop.permute.xlu0 %385
    %v436 = vunpack.c.l.b16 %v52
    %v437 = vunpack.c.l.b16 %v53
    %v438 = vunpack.c.l.b16 %v54
    %v439 = vunpack.c.l.b16 %v55
    %v440 = vunpack.c.l.b16 %v56
    %v441 = vunpack.c.l.b16 %v57
    %v442 = vunpack.c.l.b16 %v58
    %v443 = vunpack.c.l.b16 %v59
    %v444 = vunpack.c.l.b16 %v60
    %v445 = vunpack.c.l.b16 %v61
    %v446 = vunpack.c.l.b16 %v62
    %v447 = vunpack.c.l.b16 %v63
    %v448 = vunpack.c.l.b16 %v64
    %v449 = vunpack.c.l.b16 %v65
    %v450 = vunpack.c.l.b16 %v66
    %v451 = vunpack.c.l.b16 %v67
    %v452 = vunpack.c.l.b16 %v68
    %v453 = vunpack.c.l.b16 %v69
    %v454 = vunpack.c.l.b16 %v70
    %v455 = vunpack.c.l.b16 %v71
    %v456 = vunpack.c.l.b16 %v72
    %v457 = vunpack.c.l.b16 %v73
    %v458 = vunpack.c.l.b16 %v74
    %v459 = vunpack.c.l.b16 %v75
    %v460 = vunpack.c.l.b16 %v76
    %v461 = vunpack.c.l.b16 %v77
    %v462 = vunpack.c.l.b16 %v78
    %v463 = vunpack.c.l.b16 %v79
    %v464 = vunpack.c.l.b16 %v80
    %v465 = vunpack.c.l.b16 %v81
    %v466 = vunpack.c.l.b16 %v82
    %v467 = vunpack.c.l.b16 %v83
    %v468 = vunpack.c.l.b16 %v84
    %v469 = vunpack.c.l.b16 %v85
    %v470 = vunpack.c.l.b16 %v86
    %v471 = vunpack.c.l.b16 %v87
    %v472 = vunpack.c.l.b16 %v88
    %v473 = vunpack.c.l.b16 %v89
    %v474 = vunpack.c.l.b16 %v90
    %v475 = vunpack.c.l.b16 %v91
    %v476 = vunpack.c.l.b16 %v92
    %v477 = vunpack.c.l.b16 %v93
    %v478 = vunpack.c.l.b16 %v94
    %v479 = vunpack.c.l.b16 %v95
    %v480 = vunpack.c.l.b16 %v96
    %v481 = vunpack.c.l.b16 %v97
    %v482 = vunpack.c.l.b16 %v98
    %v483 = vunpack.c.l.b16 %v99
    %v484 = vpack.c.b16 %v437, %v436
    %v485 = vpack.c.b16 %v439, %v438
    %v486 = vpack.c.b16 %v441, %v440
    %v487 = vpack.c.b16 %v443, %v442
    %v488 = vpack.c.b16 %v445, %v444
    %v489 = vpack.c.b16 %v447, %v446
    %v490 = vpack.c.b16 %v449, %v448
    %v491 = vpack.c.b16 %v451, %v450
    %v492 = vpack.c.b16 %v453, %v452
    %v493 = vpack.c.b16 %v455, %v454
    %v494 = vpack.c.b16 %v457, %v456
    %v495 = vpack.c.b16 %v459, %v458
    %v496 = vpack.c.b16 %v461, %v460
    %v497 = vpack.c.b16 %v463, %v462
    %v498 = vpack.c.b16 %v465, %v464
    %v499 = vpack.c.b16 %v467, %v466
    %v500 = vpack.c.b16 %v469, %v468
    %v501 = vpack.c.b16 %v471, %v470
    %v502 = vpack.c.b16 %v473, %v472
    %v503 = vpack.c.b16 %v475, %v474
    %v504 = vpack.c.b16 %v477, %v476
    %v505 = vpack.c.b16 %v479, %v478
    %v506 = vpack.c.b16 %v481, %v480
    %v507 = vpack.c.b16 %v483, %v482
    %v548 = vunpack.c.l.b16 %v36
    %v549 = vunpack.c.l.b16 %v37
    %v550 = vunpack.c.l.b16 %v38
    %v551 = vunpack.c.l.b16 %v39
    %v552 = vunpack.c.l.b16 %v40
    %v553 = vunpack.c.l.b16 %v41
    %v554 = vunpack.c.l.b16 %v42
    %v555 = vunpack.c.l.b16 %v43
    %v556 = vunpack.c.l.b16 %v44
    %v557 = vunpack.c.l.b16 %v45
    %v558 = vunpack.c.l.b16 %v46
    %v559 = vunpack.c.l.b16 %v47
    %v560 = vunpack.c.l.b16 %v48
    %v561 = vunpack.c.l.b16 %v49
    %v562 = vunpack.c.l.b16 %v50
    %v563 = vunpack.c.l.b16 %v51
    %v564 = vpack.c.b16 %v549, %v548
    %v565 = vpack.c.b16 %v551, %v550
    %v566 = vpack.c.b16 %v553, %v552
    %v567 = vpack.c.b16 %v555, %v554
    %v568 = vpack.c.b16 %v557, %v556
    %v569 = vpack.c.b16 %v559, %v558
    %v570 = vpack.c.b16 %v561, %v560
    %v571 = vpack.c.b16 %v563, %v562
    %580 = vmatpush.bf16.msra.mxu0 %v571
    %581 = vmatpush.bf16.msra.mxu0 %v570
    %582 = vmatpush.bf16.msra.mxu0 %v569
    %583 = vmatpush.bf16.msra.mxu0 %v568
    %584 = vmatpush.bf16.msra.mxu0 %v567
    %585 = vmatpush.bf16.msra.mxu0 %v566
    %586 = vmatpush.bf16.msra.mxu0 %v565
    %587 = vmatpush.bf16.msra.mxu0 %v564
    %588 = vmatmul.bf16.gmra.mxu0 %v484
    %v589 = vpop.f32.mrf.mxu0
    %v590 = vadd.f32 %v151, %v589
    %v591 = vpop.f32.mrf.mxu0
    %v592 = vadd.f32 %v156, %v591
    %593 = vmatmul.bf16.gmra.mxu0 %v485
    %v594 = vpop.f32.mrf.mxu0
    %v595 = vadd.f32 %v161, %v594
    %v596 = vpop.f32.mrf.mxu0
    %v597 = vadd.f32 %v166, %v596
    %598 = vmatmul.bf16.gmra.mxu0 %v486
    %v599 = vpop.f32.mrf.mxu0
    %v600 = vadd.f32 %v171, %v599
    %v601 = vpop.f32.mrf.mxu0
    %v602 = vadd.f32 %v176, %v601
    %603 = vmatmul.bf16.gmra.mxu0 %v487
    %v604 = vpop.f32.mrf.mxu0
    %v605 = vadd.f32 %v181, %v604
    %v606 = vpop.f32.mrf.mxu0
    %v607 = vadd.f32 %v186, %v606
    %608 = vmatmul.bf16.gmra.mxu0 %v488
    %v609 = vpop.f32.mrf.mxu0
    %v610 = vadd.f32 %v191, %v609
    %v611 = vpop.f32.mrf.mxu0
    %v612 = vadd.f32 %v196, %v611
    %613 = vmatmul.bf16.gmra.mxu0 %v489
    %v614 = vpop.f32.mrf.mxu0
    %v615 = vadd.f32 %v201, %v614
    %v616 = vpop.f32.mrf.mxu0
    %v617 = vadd.f32 %v206, %v616
    %618 = vmatmul.bf16.gmra.mxu0 %v490
    %v619 = vpop.f32.mrf.mxu0
    %v620 = vadd.f32 %v211, %v619
    %v621 = vpop.f32.mrf.mxu0
    %v622 = vadd.f32 %v216, %v621
    %623 = vmatmul.bf16.gmra.mxu0 %v491
    %v624 = vpop.f32.mrf.mxu0
    %v625 = vadd.f32 %v221, %v624
    %v626 = vpop.f32.mrf.mxu0
    %v627 = vadd.f32 %v226, %v626
    %628 = vmatmul.bf16.gmra.mxu0 %v492
    %v629 = vpop.f32.mrf.mxu0
    %v630 = vadd.f32 %v231, %v629
    %v631 = vpop.f32.mrf.mxu0
    %v632 = vadd.f32 %v236, %v631
    %633 = vmatmul.bf16.gmra.mxu0 %v493
    %v634 = vpop.f32.mrf.mxu0
    %v635 = vadd.f32 %v241, %v634
    %v636 = vpop.f32.mrf.mxu0
    %v637 = vadd.f32 %v246, %v636
    %638 = vmatmul.bf16.gmra.mxu0 %v494
    %v639 = vpop.f32.mrf.mxu0
    %v640 = vadd.f32 %v251, %v639
    %v641 = vpop.f32.mrf.mxu0
    %v642 = vadd.f32 %v256, %v641
    %643 = vmatmul.bf16.gmra.mxu0 %v495
    %v644 = vpop.f32.mrf.mxu0
    %v645 = vadd.f32 %v261, %v644
    %v646 = vpop.f32.mrf.mxu0
    %v647 = vadd.f32 %v266, %v646
    %648 = vmatmul.bf16.gmra.mxu0 %v496
    %v649 = vpop.f32.mrf.mxu0
    %v650 = vadd.f32 %v271, %v649
    %v651 = vpop.f32.mrf.mxu0
    %v652 = vadd.f32 %v276, %v651
    %653 = vmatmul.bf16.gmra.mxu0 %v497
    %v654 = vpop.f32.mrf.mxu0
    %v655 = vadd.f32 %v281, %v654
    %v656 = vpop.f32.mrf.mxu0
    %v657 = vadd.f32 %v286, %v656
    %658 = vmatmul.bf16.gmra.mxu0 %v498
    %v659 = vpop.f32.mrf.mxu0
    %v660 = vadd.f32 %v291, %v659
    %v661 = vpop.f32.mrf.mxu0
    %v662 = vadd.f32 %v296, %v661
    %663 = vmatmul.bf16.gmra.mxu0 %v499
    %v664 = vpop.f32.mrf.mxu0
    %v665 = vadd.f32 %v301, %v664
    %v666 = vpop.f32.mrf.mxu0
    %v667 = vadd.f32 %v306, %v666
    %668 = vmatmul.bf16.gmra.mxu0 %v500
    %v669 = vpop.f32.mrf.mxu0
    %v670 = vadd.f32 %v311, %v669
    %v671 = vpop.f32.mrf.mxu0
    %v672 = vadd.f32 %v316, %v671
    %673 = vmatmul.bf16.gmra.mxu0 %v501
    %v674 = vpop.f32.mrf.mxu0
    %v675 = vadd.f32 %v321, %v674
    %v676 = vpop.f32.mrf.mxu0
    %v677 = vadd.f32 %v326, %v676
    %678 = vmatmul.bf16.gmra.mxu0 %v502
    %v679 = vpop.f32.mrf.mxu0
    %v680 = vadd.f32 %v331, %v679
    %v681 = vpop.f32.mrf.mxu0
    %v682 = vadd.f32 %v336, %v681
    %683 = vmatmul.bf16.gmra.mxu0 %v503
    %v684 = vpop.f32.mrf.mxu0
    %v685 = vadd.f32 %v341, %v684
    %v686 = vpop.f32.mrf.mxu0
    %v687 = vadd.f32 %v346, %v686
    %688 = vmatmul.bf16.gmra.mxu0 %v504
    %v689 = vpop.f32.mrf.mxu0
    %v690 = vadd.f32 %v351, %v689
    %v691 = vpop.f32.mrf.mxu0
    %v692 = vadd.f32 %v356, %v691
    %693 = vmatmul.bf16.gmra.mxu0 %v505
    %v694 = vpop.f32.mrf.mxu0
    %v695 = vadd.f32 %v361, %v694
    %v696 = vpop.f32.mrf.mxu0
    %v697 = vadd.f32 %v366, %v696
    %698 = vmatmul.bf16.gmra.mxu0 %v506
    %v699 = vpop.f32.mrf.mxu0
    %v700 = vadd.f32 %v371, %v699
    %v701 = vpop.f32.mrf.mxu0
    %v702 = vadd.f32 %v376, %v701
    %703 = vmatmul.bf16.gmra.mxu0 %v507
    %v704 = vpop.f32.mrf.mxu0
    %v705 = vadd.f32 %v381, %v704
    %v706 = vpop.f32.mrf.mxu0
    %v707 = vadd.f32 %v386, %v706
    %708 = vdwg.mxu0
    %v709 = vmax.f32 %v590, 0.0
    %v710 = vmax.f32 %v592, 0.0
    %v711 = vmax.f32 %v595, 0.0
    %v712 = vmax.f32 %v597, 0.0
    %v713 = vmax.f32 %v600, 0.0
    %v714 = vmax.f32 %v602, 0.0
    %v715 = vmax.f32 %v605, 0.0
    %v716 = vmax.f32 %v607, 0.0
    %v717 = vmax.f32 %v610, 0.0
    %v718 = vmax.f32 %v612, 0.0
    %v719 = vmax.f32 %v615, 0.0
    %v720 = vmax.f32 %v617, 0.0
    %v721 = vmax.f32 %v620, 0.0
    %v722 = vmax.f32 %v622, 0.0
    %v723 = vmax.f32 %v625, 0.0
    %v724 = vmax.f32 %v627, 0.0
    %v725 = vmax.f32 %v630, 0.0
    %v726 = vmax.f32 %v632, 0.0
    %v727 = vmax.f32 %v635, 0.0
    %v728 = vmax.f32 %v637, 0.0
    %v729 = vmax.f32 %v640, 0.0
    %v730 = vmax.f32 %v642, 0.0
    %v731 = vmax.f32 %v645, 0.0
    %v732 = vmax.f32 %v647, 0.0
    %v733 = vmax.f32 %v650, 0.0
    %v734 = vmax.f32 %v652, 0.0
    %v735 = vmax.f32 %v655, 0.0
    %v736 = vmax.f32 %v657, 0.0
    %v737 = vmax.f32 %v660, 0.0
    %v738 = vmax.f32 %v662, 0.0
    %v739 = vmax.f32 %v665, 0.0
    %v740 = vmax.f32 %v667, 0.0
    %v741 = vmax.f32 %v670, 0.0
    %v742 = vmax.f32 %v672, 0.0
    %v743 = vmax.f32 %v675, 0.0
    %v744 = vmax.f32 %v677, 0.0
    %v745 = vmax.f32 %v680, 0.0
    %v746 = vmax.f32 %v682, 0.0
    %v747 = vmax.f32 %v685, 0.0
    %v748 = vmax.f32 %v687, 0.0
    %v749 = vmax.f32 %v690, 0.0
    %v750 = vmax.f32 %v692, 0.0
    %v751 = vmax.f32 %v695, 0.0
    %v752 = vmax.f32 %v697, 0.0
    %v753 = vmax.f32 %v700, 0.0
    %v754 = vmax.f32 %v702, 0.0
    %v755 = vmax.f32 %v705, 0.0
    %v756 = vmax.f32 %v707, 0.0
    %v757 = vpack.c.bf16 %v710, %v709
    %v758 = vpack.c.bf16 %v712, %v711
    %v759 = vpack.c.bf16 %v714, %v713
    %v760 = vpack.c.bf16 %v716, %v715
    %v761 = vpack.c.bf16 %v718, %v717
    %v762 = vpack.c.bf16 %v720, %v719
    %v763 = vpack.c.bf16 %v722, %v721
    %v764 = vpack.c.bf16 %v724, %v723
    %v765 = vpack.c.bf16 %v726, %v725
    %v766 = vpack.c.bf16 %v728, %v727
    %v767 = vpack.c.bf16 %v730, %v729
    %v768 = vpack.c.bf16 %v732, %v731
    %v769 = vpack.c.bf16 %v734, %v733
    %v770 = vpack.c.bf16 %v736, %v735
    %v771 = vpack.c.bf16 %v738, %v737
    %v772 = vpack.c.bf16 %v740, %v739
    %v773 = vpack.c.bf16 %v742, %v741
    %v774 = vpack.c.bf16 %v744, %v743
    %v775 = vpack.c.bf16 %v746, %v745
    %v776 = vpack.c.bf16 %v748, %v747
    %v777 = vpack.c.bf16 %v750, %v749
    %v778 = vpack.c.bf16 %v752, %v751
    %v779 = vpack.c.bf16 %v754, %v753
    %v780 = vpack.c.bf16 %v756, %v755
    %v781 = vld [vmem:[%s2] sm:$0xff]
    %v782 = vld [vmem:[%s2 + $0x8] sm:$0xf]
    %v783 = vld [vmem:[%s2 + $0xc] sm:$0xff]
    %v784 = vld [vmem:[%s2 + $0x14] sm:$0xf]
    %v785 = vld [vmem:[%s2 + $0x18] sm:$0xff]
    %v786 = vld [vmem:[%s2 + $0x20] sm:$0xf]
    %v787 = vld [vmem:[%s2 + $0x24] sm:$0xff]
    %v788 = vld [vmem:[%s2 + $0x2c] sm:$0xf]
    %v789 = vld [vmem:[%s2 + $0x30] sm:$0xff]
    %v790 = vld [vmem:[%s2 + $0x38] sm:$0xf]
    %v791 = vld [vmem:[%s2 + $0x3c] sm:$0xff]
    %v792 = vld [vmem:[%s2 + $0x44] sm:$0xf]
    %v793 = vld [vmem:[%s2 + $0x48] sm:$0xff]
    %v794 = vld [vmem:[%s2 + $0x50] sm:$0xf]
    %v795 = vld [vmem:[%s2 + $0x54] sm:$0xff]
    %v796 = vld [vmem:[%s2 + $0x5c] sm:$0xf]
    %v797 = vld [vmem:[%s2 + $0x60] sm:$0xff]
    %v798 = vld [vmem:[%s2 + $0x68] sm:$0xf]
    %v799 = vld [vmem:[%s2 + $0x6c] sm:$0xff]
    %v800 = vld [vmem:[%s2 + $0x74] sm:$0xf]
    %v801 = vld [vmem:[%s2 + $0x78] sm:$0xff]
    %v802 = vld [vmem:[%s2 + $0x80] sm:$0xf]
    %v803 = vld [vmem:[%s2 + $0x84] sm:$0xff]
    %v804 = vld [vmem:[%s2 + $0x8c] sm:$0xf]
    %v805 = vld [vmem:[%s2 + $0x90] sm:$0xff]
    %v806 = vld [vmem:[%s2 + $0x98] sm:$0xf]
    %v807 = vld [vmem:[%s2 + $0x9c] sm:$0xff]
    %v808 = vld [vmem:[%s2 + $0xa4] sm:$0xf]
    %v809 = vld [vmem:[%s2 + $0xa8] sm:$0xff]
    %v810 = vld [vmem:[%s2 + $0xb0] sm:$0xf]
    %v811 = vld [vmem:[%s2 + $0xb4] sm:$0xff]
    %v812 = vld [vmem:[%s2 + $0xbc] sm:$0xf]
    %v813 = vld [vmem:[%s2 + $0xc0] sm:$0xff]
    %v814 = vld [vmem:[%s2 + $0xc8] sm:$0xf]
    %v815 = vld [vmem:[%s2 + $0xcc] sm:$0xff]
    %v816 = vld [vmem:[%s2 + $0xd4] sm:$0xf]
    %v817 = vld [vmem:[%s2 + $0xd8] sm:$0xff]
    %v818 = vld [vmem:[%s2 + $0xe0] sm:$0xf]
    %v819 = vld [vmem:[%s2 + $0xe4] sm:$0xff]
    %v820 = vld [vmem:[%s2 + $0xec] sm:$0xf]
    %v821 = vld [vmem:[%s2 + $0xf0] sm:$0xff]
    %v822 = vld [vmem:[%s2 + $0xf8] sm:$0xf]
    %v823 = vld [vmem:[%s2 + $0xfc] sm:$0xff]
    %v824 = vld [vmem:[%s2 + $0x104] sm:$0xf]
    %v825 = vld [vmem:[%s2 + $0x108] sm:$0xff]
    %v826 = vld [vmem:[%s2 + $0x110] sm:$0xf]
    %v827 = vld [vmem:[%s2 + $0x114] sm:$0xff]
    %v828 = vld [vmem:[%s2 + $0x11c] sm:$0xf]
    %v829 = vld [vmem:[%s6] sm:$0xff]
    %v830 = vld [vmem:[%s6 + $0x8] sm:$0xff]
    %v831 = vld [vmem:[%s6 + $0x10] sm:$0xff]
    %v832 = vld [vmem:[%s6 + $0x18] sm:$0xff]
    %v833 = vld [vmem:[%s6 + $0x20] sm:$0xff]
    %v834 = vld [vmem:[%s6 + $0x28] sm:$0xff]
    %v835 = vld [vmem:[%s6 + $0x30] sm:$0xff]
    %v836 = vld [vmem:[%s6 + $0x38] sm:$0xff]
    %v837 = vld [vmem:[%s6 + $0x40] sm:$0xff]
    %v838 = vld [vmem:[%s6 + $0x48] sm:$0xff]
    %v839 = vld [vmem:[%s6 + $0x50] sm:$0xff]
    %v840 = vld [vmem:[%s6 + $0x58] sm:$0xff]
    %v841 = vld [vmem:[%s6 + $0x60] sm:$0xff]
    %v842 = vld [vmem:[%s6 + $0x68] sm:$0xff]
    %v843 = vld [vmem:[%s6 + $0x70] sm:$0xff]
    %v844 = vld [vmem:[%s6 + $0x78] sm:$0xff]
    %v845 = vld [vmem:[%s6 + $0x80] sm:$0xff]
    %v846 = vld [vmem:[%s6 + $0x88] sm:$0xff]
    %v847 = vld [vmem:[%s6 + $0x90] sm:$0xff]
    %v848 = vld [vmem:[%s6 + $0x98] sm:$0xff]
    %v849 = vld [vmem:[%s6 + $0xa0] sm:$0xff]
    %v850 = vld [vmem:[%s6 + $0xa8] sm:$0xff]
    %v851 = vld [vmem:[%s6 + $0xb0] sm:$0xff]
    %v852 = vld [vmem:[%s6 + $0xb8] sm:$0xff]
    %854 = vset.pattern.permute.xlu0 0
    %855 = vperm.xlu0 %854, %v829
    %v856 = vpop.permute.xlu0 %855
    %859 = vset.pattern.permute.xlu0 0
    %860 = vperm.xlu0 %859, %v830
    %v861 = vpop.permute.xlu0 %860
    %864 = vset.pattern.permute.xlu0 0
    %865 = vperm.xlu0 %864, %v831
    %v866 = vpop.permute.xlu0 %865
    %869 = vset.pattern.permute.xlu0 0
    %870 = vperm.xlu0 %869, %v832
    %v871 = vpop.permute.xlu0 %870
    %874 = vset.pattern.permute.xlu0 0
    %875 = vperm.xlu0 %874, %v833
    %v876 = vpop.permute.xlu0 %875
    %879 = vset.pattern.permute.xlu0 0
    %880 = vperm.xlu0 %879, %v834
    %v881 = vpop.permute.xlu0 %880
    %884 = vset.pattern.permute.xlu0 0
    %885 = vperm.xlu0 %884, %v835
    %v886 = vpop.permute.xlu0 %885
    %889 = vset.pattern.permute.xlu0 0
    %890 = vperm.xlu0 %889, %v836
    %v891 = vpop.permute.xlu0 %890
    %894 = vset.pattern.permute.xlu0 0
    %895 = vperm.xlu0 %894, %v837
    %v896 = vpop.permute.xlu0 %895
    %899 = vset.pattern.permute.xlu0 0
    %900 = vperm.xlu0 %899, %v838
    %v901 = vpop.permute.xlu0 %900
    %904 = vset.pattern.permute.xlu0 0
    %905 = vperm.xlu0 %904, %v839
    %v906 = vpop.permute.xlu0 %905
    %909 = vset.pattern.permute.xlu0 0
    %910 = vperm.xlu0 %909, %v840
    %v911 = vpop.permute.xlu0 %910
    %914 = vset.pattern.permute.xlu0 0
    %915 = vperm.xlu0 %914, %v841
    %v916 = vpop.permute.xlu0 %915
    %919 = vset.pattern.permute.xlu0 0
    %920 = vperm.xlu0 %919, %v842
    %v921 = vpop.permute.xlu0 %920
    %924 = vset.pattern.permute.xlu0 0
    %925 = vperm.xlu0 %924, %v843
    %v926 = vpop.permute.xlu0 %925
    %929 = vset.pattern.permute.xlu0 0
    %930 = vperm.xlu0 %929, %v844
    %v931 = vpop.permute.xlu0 %930
    %934 = vset.pattern.permute.xlu0 0
    %935 = vperm.xlu0 %934, %v845
    %v936 = vpop.permute.xlu0 %935
    %939 = vset.pattern.permute.xlu0 0
    %940 = vperm.xlu0 %939, %v846
    %v941 = vpop.permute.xlu0 %940
    %944 = vset.pattern.permute.xlu0 0
    %945 = vperm.xlu0 %944, %v847
    %v946 = vpop.permute.xlu0 %945
    %949 = vset.pattern.permute.xlu0 0
    %950 = vperm.xlu0 %949, %v848
    %v951 = vpop.permute.xlu0 %950
    %954 = vset.pattern.permute.xlu0 0
    %955 = vperm.xlu0 %954, %v849
    %v956 = vpop.permute.xlu0 %955
    %959 = vset.pattern.permute.xlu0 0
    %960 = vperm.xlu0 %959, %v850
    %v961 = vpop.permute.xlu0 %960
    %964 = vset.pattern.permute.xlu0 0
    %965 = vperm.xlu0 %964, %v851
    %v966 = vpop.permute.xlu0 %965
    %969 = vset.pattern.permute.xlu0 0
    %970 = vperm.xlu0 %969, %v852
    %v971 = vpop.permute.xlu0 %970
    %v1021 = vunpack.c.l.b16 %v781
    %v1022 = vunpack.c.h.b16 %v781
    %v1023 = vunpack.c.l.b16 %v782
    %v1024 = vunpack.c.l.b16 %v783
    %v1025 = vunpack.c.h.b16 %v783
    %v1026 = vunpack.c.l.b16 %v784
    %v1027 = vunpack.c.l.b16 %v785
    %v1028 = vunpack.c.h.b16 %v785
    %v1029 = vunpack.c.l.b16 %v786
    %v1030 = vunpack.c.l.b16 %v787
    %v1031 = vunpack.c.h.b16 %v787
    %v1032 = vunpack.c.l.b16 %v788
    %v1033 = vunpack.c.l.b16 %v789
    %v1034 = vunpack.c.h.b16 %v789
    %v1035 = vunpack.c.l.b16 %v790
    %v1036 = vunpack.c.l.b16 %v791
    %v1037 = vunpack.c.h.b16 %v791
    %v1038 = vunpack.c.l.b16 %v792
    %v1039 = vunpack.c.l.b16 %v793
    %v1040 = vunpack.c.h.b16 %v793
    %v1041 = vunpack.c.l.b16 %v794
    %v1042 = vunpack.c.l.b16 %v795
    %v1043 = vunpack.c.h.b16 %v795
    %v1044 = vunpack.c.l.b16 %v796
    %v1045 = vunpack.c.l.b16 %v797
    %v1046 = vunpack.c.h.b16 %v797
    %v1047 = vunpack.c.l.b16 %v798
    %v1048 = vunpack.c.l.b16 %v799
    %v1049 = vunpack.c.h.b16 %v799
    %v1050 = vunpack.c.l.b16 %v800
    %v1051 = vunpack.c.l.b16 %v801
    %v1052 = vunpack.c.h.b16 %v801
    %v1053 = vunpack.c.l.b16 %v802
    %v1054 = vunpack.c.l.b16 %v803
    %v1055 = vunpack.c.h.b16 %v803
    %v1056 = vunpack.c.l.b16 %v804
    %v1057 = vunpack.c.l.b16 %v805
    %v1058 = vunpack.c.h.b16 %v805
    %v1059 = vunpack.c.l.b16 %v806
    %v1060 = vunpack.c.l.b16 %v807
    %v1061 = vunpack.c.h.b16 %v807
    %v1062 = vunpack.c.l.b16 %v808
    %v1063 = vunpack.c.l.b16 %v809
    %v1064 = vunpack.c.h.b16 %v809
    %v1065 = vunpack.c.l.b16 %v810
    %v1066 = vunpack.c.l.b16 %v811
    %v1067 = vunpack.c.h.b16 %v811
    %v1068 = vunpack.c.l.b16 %v812
    %v1069 = vunpack.c.l.b16 %v813
    %v1070 = vunpack.c.h.b16 %v813
    %v1071 = vunpack.c.l.b16 %v814
    %v1072 = vunpack.c.l.b16 %v815
    %v1073 = vunpack.c.h.b16 %v815
    %v1074 = vunpack.c.l.b16 %v816
    %v1075 = vunpack.c.l.b16 %v817
    %v1076 = vunpack.c.h.b16 %v817
    %v1077 = vunpack.c.l.b16 %v818
    %v1078 = vunpack.c.l.b16 %v819
    %v1079 = vunpack.c.h.b16 %v819
    %v1080 = vunpack.c.l.b16 %v820
    %v1081 = vunpack.c.l.b16 %v821
    %v1082 = vunpack.c.h.b16 %v821
    %v1083 = vunpack.c.l.b16 %v822
    %v1084 = vunpack.c.l.b16 %v823
    %v1085 = vunpack.c.h.b16 %v823
    %v1086 = vunpack.c.l.b16 %v824
    %v1087 = vunpack.c.l.b16 %v825
    %v1088 = vunpack.c.h.b16 %v825
    %v1089 = vunpack.c.l.b16 %v826
    %v1090 = vunpack.c.l.b16 %v827
    %v1091 = vunpack.c.h.b16 %v827
    %v1092 = vunpack.c.l.b16 %v828
    %v1093 = vpack.c.b16 %v1024, %v1021
    %v1094 = vpack.c.b16 %v1025, %v1022
    %v1095 = vpack.c.b16 %v1026, %v1023
    %v1096 = vpack.c.b16 %v1030, %v1027
    %v1097 = vpack.c.b16 %v1031, %v1028
    %v1098 = vpack.c.b16 %v1032, %v1029
    %v1099 = vpack.c.b16 %v1036, %v1033
    %v1100 = vpack.c.b16 %v1037, %v1034
    %v1101 = vpack.c.b16 %v1038, %v1035
    %v1102 = vpack.c.b16 %v1042, %v1039
    %v1103 = vpack.c.b16 %v1043, %v1040
    %v1104 = vpack.c.b16 %v1044, %v1041
    %v1105 = vpack.c.b16 %v1048, %v1045
    %v1106 = vpack.c.b16 %v1049, %v1046
    %v1107 = vpack.c.b16 %v1050, %v1047
    %v1108 = vpack.c.b16 %v1054, %v1051
    %v1109 = vpack.c.b16 %v1055, %v1052
    %v1110 = vpack.c.b16 %v1056, %v1053
    %v1111 = vpack.c.b16 %v1060, %v1057
    %v1112 = vpack.c.b16 %v1061, %v1058
    %v1113 = vpack.c.b16 %v1062, %v1059
    %v1114 = vpack.c.b16 %v1066, %v1063
    %v1115 = vpack.c.b16 %v1067, %v1064
    %v1116 = vpack.c.b16 %v1068, %v1065
    %v1117 = vpack.c.b16 %v1072, %v1069
    %v1118 = vpack.c.b16 %v1073, %v1070
    %v1119 = vpack.c.b16 %v1074, %v1071
    %v1120 = vpack.c.b16 %v1078, %v1075
    %v1121 = vpack.c.b16 %v1079, %v1076
    %v1122 = vpack.c.b16 %v1080, %v1077
    %v1123 = vpack.c.b16 %v1084, %v1081
    %v1124 = vpack.c.b16 %v1085, %v1082
    %v1125 = vpack.c.b16 %v1086, %v1083
    %v1126 = vpack.c.b16 %v1090, %v1087
    %v1127 = vpack.c.b16 %v1091, %v1088
    %v1128 = vpack.c.b16 %v1092, %v1089
    %1165 = vmatpush.bf16.msra.mxu0 %v764
    %1166 = vmatpush.bf16.msra.mxu0 %v763
    %1167 = vmatpush.bf16.msra.mxu0 %v762
    %1168 = vmatpush.bf16.msra.mxu0 %v761
    %1169 = vmatpush.bf16.msra.mxu0 %v760
    %1170 = vmatpush.bf16.msra.mxu0 %v759
    %1171 = vmatpush.bf16.msra.mxu0 %v758
    %1172 = vmatpush.bf16.msra.mxu0 %v757
    %1173 = vmatmul.bf16.gmra.mxu0 %v1093
    %v1174 = vpop.f32.mrf.mxu0
    %v1175 = vadd.f32 %v856, %v1174
    %v1176 = vpop.f32.mrf.mxu0
    %v1177 = vadd.f32 %v861, %v1176
    %1178 = vmatmul.bf16.gmra.mxu0 %v1096
    %v1179 = vpop.f32.mrf.mxu0
    %v1180 = vadd.f32 %v866, %v1179
    %v1181 = vpop.f32.mrf.mxu0
    %v1182 = vadd.f32 %v871, %v1181
    %1183 = vmatmul.bf16.gmra.mxu0 %v1099
    %v1184 = vpop.f32.mrf.mxu0
    %v1185 = vadd.f32 %v876, %v1184
    %v1186 = vpop.f32.mrf.mxu0
    %v1187 = vadd.f32 %v881, %v1186
    %1188 = vmatmul.bf16.gmra.mxu0 %v1102
    %v1189 = vpop.f32.mrf.mxu0
    %v1190 = vadd.f32 %v886, %v1189
    %v1191 = vpop.f32.mrf.mxu0
    %v1192 = vadd.f32 %v891, %v1191
    %1193 = vmatmul.bf16.gmra.mxu0 %v1105
    %v1194 = vpop.f32.mrf.mxu0
    %v1195 = vadd.f32 %v896, %v1194
    %v1196 = vpop.f32.mrf.mxu0
    %v1197 = vadd.f32 %v901, %v1196
    %1198 = vmatmul.bf16.gmra.mxu0 %v1108
    %v1199 = vpop.f32.mrf.mxu0
    %v1200 = vadd.f32 %v906, %v1199
    %v1201 = vpop.f32.mrf.mxu0
    %v1202 = vadd.f32 %v911, %v1201
    %1203 = vmatmul.bf16.gmra.mxu0 %v1111
    %v1204 = vpop.f32.mrf.mxu0
    %v1205 = vadd.f32 %v916, %v1204
    %v1206 = vpop.f32.mrf.mxu0
    %v1207 = vadd.f32 %v921, %v1206
    %1208 = vmatmul.bf16.gmra.mxu0 %v1114
    %v1209 = vpop.f32.mrf.mxu0
    %v1210 = vadd.f32 %v926, %v1209
    %v1211 = vpop.f32.mrf.mxu0
    %v1212 = vadd.f32 %v931, %v1211
    %1213 = vmatmul.bf16.gmra.mxu0 %v1117
    %v1214 = vpop.f32.mrf.mxu0
    %v1215 = vadd.f32 %v936, %v1214
    %v1216 = vpop.f32.mrf.mxu0
    %v1217 = vadd.f32 %v941, %v1216
    %1218 = vmatmul.bf16.gmra.mxu0 %v1120
    %v1219 = vpop.f32.mrf.mxu0
    %v1220 = vadd.f32 %v946, %v1219
    %v1221 = vpop.f32.mrf.mxu0
    %v1222 = vadd.f32 %v951, %v1221
    %1223 = vmatmul.bf16.gmra.mxu0 %v1123
    %v1224 = vpop.f32.mrf.mxu0
    %v1225 = vadd.f32 %v956, %v1224
    %v1226 = vpop.f32.mrf.mxu0
    %v1227 = vadd.f32 %v961, %v1226
    %1228 = vmatmul.bf16.gmra.mxu0 %v1126
    %v1229 = vpop.f32.mrf.mxu0
    %v1230 = vadd.f32 %v966, %v1229
    %v1231 = vpop.f32.mrf.mxu0
    %v1232 = vadd.f32 %v971, %v1231
    %1233 = vdwg.mxu0
    %1234 = vmatpush.bf16.msra.mxu0 %v772
    %1235 = vmatpush.bf16.msra.mxu0 %v771
    %1236 = vmatpush.bf16.msra.mxu0 %v770
    %1237 = vmatpush.bf16.msra.mxu0 %v769
    %1238 = vmatpush.bf16.msra.mxu0 %v768
    %1239 = vmatpush.bf16.msra.mxu0 %v767
    %1240 = vmatpush.bf16.msra.mxu0 %v766
    %1241 = vmatpush.bf16.msra.mxu0 %v765
    %1242 = vmatmul.bf16.gmra.mxu0 %v1094
    %v1243 = vpop.f32.mrf.mxu0
    %v1244 = vadd.f32 %v1175, %v1243
    %v1245 = vpop.f32.mrf.mxu0
    %v1246 = vadd.f32 %v1177, %v1245
    %1247 = vmatmul.bf16.gmra.mxu0 %v1097
    %v1248 = vpop.f32.mrf.mxu0
    %v1249 = vadd.f32 %v1180, %v1248
    %v1250 = vpop.f32.mrf.mxu0
    %v1251 = vadd.f32 %v1182, %v1250
    %1252 = vmatmul.bf16.gmra.mxu0 %v1100
    %v1253 = vpop.f32.mrf.mxu0
    %v1254 = vadd.f32 %v1185, %v1253
    %v1255 = vpop.f32.mrf.mxu0
    %v1256 = vadd.f32 %v1187, %v1255
    %1257 = vmatmul.bf16.gmra.mxu0 %v1103
    %v1258 = vpop.f32.mrf.mxu0
    %v1259 = vadd.f32 %v1190, %v1258
    %v1260 = vpop.f32.mrf.mxu0
    %v1261 = vadd.f32 %v1192, %v1260
    %1262 = vmatmul.bf16.gmra.mxu0 %v1106
    %v1263 = vpop.f32.mrf.mxu0
    %v1264 = vadd.f32 %v1195, %v1263
    %v1265 = vpop.f32.mrf.mxu0
    %v1266 = vadd.f32 %v1197, %v1265
    %1267 = vmatmul.bf16.gmra.mxu0 %v1109
    %v1268 = vpop.f32.mrf.mxu0
    %v1269 = vadd.f32 %v1200, %v1268
    %v1270 = vpop.f32.mrf.mxu0
    %v1271 = vadd.f32 %v1202, %v1270
    %1272 = vmatmul.bf16.gmra.mxu0 %v1112
    %v1273 = vpop.f32.mrf.mxu0
    %v1274 = vadd.f32 %v1205, %v1273
    %v1275 = vpop.f32.mrf.mxu0
    %v1276 = vadd.f32 %v1207, %v1275
    %1277 = vmatmul.bf16.gmra.mxu0 %v1115
    %v1278 = vpop.f32.mrf.mxu0
    %v1279 = vadd.f32 %v1210, %v1278
    %v1280 = vpop.f32.mrf.mxu0
    %v1281 = vadd.f32 %v1212, %v1280
    %1282 = vmatmul.bf16.gmra.mxu0 %v1118
    %v1283 = vpop.f32.mrf.mxu0
    %v1284 = vadd.f32 %v1215, %v1283
    %v1285 = vpop.f32.mrf.mxu0
    %v1286 = vadd.f32 %v1217, %v1285
    %1287 = vmatmul.bf16.gmra.mxu0 %v1121
    %v1288 = vpop.f32.mrf.mxu0
    %v1289 = vadd.f32 %v1220, %v1288
    %v1290 = vpop.f32.mrf.mxu0
    %v1291 = vadd.f32 %v1222, %v1290
    %1292 = vmatmul.bf16.gmra.mxu0 %v1124
    %v1293 = vpop.f32.mrf.mxu0
    %v1294 = vadd.f32 %v1225, %v1293
    %v1295 = vpop.f32.mrf.mxu0
    %v1296 = vadd.f32 %v1227, %v1295
    %1297 = vmatmul.bf16.gmra.mxu0 %v1127
    %v1298 = vpop.f32.mrf.mxu0
    %v1299 = vadd.f32 %v1230, %v1298
    %v1300 = vpop.f32.mrf.mxu0
    %v1301 = vadd.f32 %v1232, %v1300
    %1302 = vdwg.mxu0
    %1303 = vmatpush.bf16.msra.mxu0 %v780
    %1304 = vmatpush.bf16.msra.mxu0 %v779
    %1305 = vmatpush.bf16.msra.mxu0 %v778
    %1306 = vmatpush.bf16.msra.mxu0 %v777
    %1307 = vmatpush.bf16.msra.mxu0 %v776
    %1308 = vmatpush.bf16.msra.mxu0 %v775
    %1309 = vmatpush.bf16.msra.mxu0 %v774
    %1310 = vmatpush.bf16.msra.mxu0 %v773
    %1311 = vmatmul.bf16.gmra.mxu0 %v1095
    %v1312 = vpop.f32.mrf.mxu0
    %v1313 = vadd.f32 %v1244, %v1312
    %v1314 = vpop.f32.mrf.mxu0
    %v1315 = vadd.f32 %v1246, %v1314
    %1316 = vmatmul.bf16.gmra.mxu0 %v1098
    %v1317 = vpop.f32.mrf.mxu0
    %v1318 = vadd.f32 %v1249, %v1317
    %v1319 = vpop.f32.mrf.mxu0
    %v1320 = vadd.f32 %v1251, %v1319
    %1321 = vmatmul.bf16.gmra.mxu0 %v1101
    %v1322 = vpop.f32.mrf.mxu0
    %v1323 = vadd.f32 %v1254, %v1322
    %v1324 = vpop.f32.mrf.mxu0
    %v1325 = vadd.f32 %v1256, %v1324
    %1326 = vmatmul.bf16.gmra.mxu0 %v1104
    %v1327 = vpop.f32.mrf.mxu0
    %v1328 = vadd.f32 %v1259, %v1327
    %v1329 = vpop.f32.mrf.mxu0
    %v1330 = vadd.f32 %v1261, %v1329
    %1331 = vmatmul.bf16.gmra.mxu0 %v1107
    %v1332 = vpop.f32.mrf.mxu0
    %v1333 = vadd.f32 %v1264, %v1332
    %v1334 = vpop.f32.mrf.mxu0
    %v1335 = vadd.f32 %v1266, %v1334
    %1336 = vmatmul.bf16.gmra.mxu0 %v1110
    %v1337 = vpop.f32.mrf.mxu0
    %v1338 = vadd.f32 %v1269, %v1337
    %v1339 = vpop.f32.mrf.mxu0
    %v1340 = vadd.f32 %v1271, %v1339
    %1341 = vmatmul.bf16.gmra.mxu0 %v1113
    %v1342 = vpop.f32.mrf.mxu0
    %v1343 = vadd.f32 %v1274, %v1342
    %v1344 = vpop.f32.mrf.mxu0
    %v1345 = vadd.f32 %v1276, %v1344
    %1346 = vmatmul.bf16.gmra.mxu0 %v1116
    %v1347 = vpop.f32.mrf.mxu0
    %v1348 = vadd.f32 %v1279, %v1347
    %v1349 = vpop.f32.mrf.mxu0
    %v1350 = vadd.f32 %v1281, %v1349
    %1351 = vmatmul.bf16.gmra.mxu0 %v1119
    %v1352 = vpop.f32.mrf.mxu0
    %v1353 = vadd.f32 %v1284, %v1352
    %v1354 = vpop.f32.mrf.mxu0
    %v1355 = vadd.f32 %v1286, %v1354
    %1356 = vmatmul.bf16.gmra.mxu0 %v1122
    %v1357 = vpop.f32.mrf.mxu0
    %v1358 = vadd.f32 %v1289, %v1357
    %v1359 = vpop.f32.mrf.mxu0
    %v1360 = vadd.f32 %v1291, %v1359
    %1361 = vmatmul.bf16.gmra.mxu0 %v1125
    %v1362 = vpop.f32.mrf.mxu0
    %v1363 = vadd.f32 %v1294, %v1362
    %v1364 = vpop.f32.mrf.mxu0
    %v1365 = vadd.f32 %v1296, %v1364
    %1366 = vmatmul.bf16.gmra.mxu0 %v1128
    %v1367 = vpop.f32.mrf.mxu0
    %v1368 = vadd.f32 %v1299, %v1367
    %v1369 = vpop.f32.mrf.mxu0
    %v1370 = vadd.f32 %v1301, %v1369
    %1371 = vdwg.mxu0
    %v1372 = vmax.f32 %v1313, 0.0
    %v1373 = vmax.f32 %v1315, 0.0
    %v1374 = vmax.f32 %v1318, 0.0
    %v1375 = vmax.f32 %v1320, 0.0
    %v1376 = vmax.f32 %v1323, 0.0
    %v1377 = vmax.f32 %v1325, 0.0
    %v1378 = vmax.f32 %v1328, 0.0
    %v1379 = vmax.f32 %v1330, 0.0
    %v1380 = vmax.f32 %v1333, 0.0
    %v1381 = vmax.f32 %v1335, 0.0
    %v1382 = vmax.f32 %v1338, 0.0
    %v1383 = vmax.f32 %v1340, 0.0
    %v1384 = vmax.f32 %v1343, 0.0
    %v1385 = vmax.f32 %v1345, 0.0
    %v1386 = vmax.f32 %v1348, 0.0
    %v1387 = vmax.f32 %v1350, 0.0
    %v1388 = vmax.f32 %v1353, 0.0
    %v1389 = vmax.f32 %v1355, 0.0
    %v1390 = vmax.f32 %v1358, 0.0
    %v1391 = vmax.f32 %v1360, 0.0
    %v1392 = vmax.f32 %v1363, 0.0
    %v1393 = vmax.f32 %v1365, 0.0
    %v1394 = vmax.f32 %v1368, 0.0
    %v1395 = vmax.f32 %v1370, 0.0
    %v1396 = vpack.c.bf16 %v1373, %v1372
    %v1397 = vpack.c.bf16 %v1375, %v1374
    %v1398 = vpack.c.bf16 %v1377, %v1376
    %v1399 = vpack.c.bf16 %v1379, %v1378
    %v1400 = vpack.c.bf16 %v1381, %v1380
    %v1401 = vpack.c.bf16 %v1383, %v1382
    %v1402 = vpack.c.bf16 %v1385, %v1384
    %v1403 = vpack.c.bf16 %v1387, %v1386
    %v1404 = vpack.c.bf16 %v1389, %v1388
    %v1405 = vpack.c.bf16 %v1391, %v1390
    %v1406 = vpack.c.bf16 %v1393, %v1392
    %v1407 = vpack.c.bf16 %v1395, %v1394
    %v1408 = vld [vmem:[%s3] sm:$0xff]
    %v1409 = vld [vmem:[%s3 + $0x8] sm:$0xff]
    %v1410 = vld [vmem:[%s3 + $0x10] sm:$0xff]
    %v1411 = vld [vmem:[%s3 + $0x18] sm:$0xff]
    %v1412 = vld [vmem:[%s3 + $0x20] sm:$0xff]
    %v1413 = vld [vmem:[%s3 + $0x28] sm:$0xff]
    %v1414 = vld [vmem:[%s3 + $0x30] sm:$0xff]
    %v1415 = vld [vmem:[%s3 + $0x38] sm:$0xff]
    %v1416 = vld [vmem:[%s7] sm:$0xff]
    %v1417 = vld [vmem:[%s7 + $0x8] sm:$0xff]
    %v1418 = vld [vmem:[%s7 + $0x10] sm:$0xff]
    %v1419 = vld [vmem:[%s7 + $0x18] sm:$0xff]
    %v1420 = vld [vmem:[%s7 + $0x20] sm:$0xff]
    %v1421 = vld [vmem:[%s7 + $0x28] sm:$0xff]
    %v1422 = vld [vmem:[%s7 + $0x30] sm:$0xff]
    %v1423 = vld [vmem:[%s7 + $0x38] sm:$0xff]
    %1425 = vset.pattern.permute.xlu0 0
    %1426 = vperm.xlu0 %1425, %v1416
    %v1427 = vpop.permute.xlu0 %1426
    %1430 = vset.pattern.permute.xlu0 0
    %1431 = vperm.xlu0 %1430, %v1417
    %v1432 = vpop.permute.xlu0 %1431
    %1435 = vset.pattern.permute.xlu0 0
    %1436 = vperm.xlu0 %1435, %v1418
    %v1437 = vpop.permute.xlu0 %1436
    %1440 = vset.pattern.permute.xlu0 0
    %1441 = vperm.xlu0 %1440, %v1419
    %v1442 = vpop.permute.xlu0 %1441
    %1445 = vset.pattern.permute.xlu0 0
    %1446 = vperm.xlu0 %1445, %v1420
    %v1447 = vpop.permute.xlu0 %1446
    %1450 = vset.pattern.permute.xlu0 0
    %1451 = vperm.xlu0 %1450, %v1421
    %v1452 = vpop.permute.xlu0 %1451
    %1455 = vset.pattern.permute.xlu0 0
    %1456 = vperm.xlu0 %1455, %v1422
    %v1457 = vpop.permute.xlu0 %1456
    %1460 = vset.pattern.permute.xlu0 0
    %1461 = vperm.xlu0 %1460, %v1423
    %v1462 = vpop.permute.xlu0 %1461
    %v1472 = vunpack.c.l.b16 %v1408
    %v1473 = vunpack.c.h.b16 %v1408
    %v1474 = vunpack.c.l.b16 %v1409
    %v1475 = vunpack.c.h.b16 %v1409
    %v1476 = vunpack.c.l.b16 %v1410
    %v1477 = vunpack.c.h.b16 %v1410
    %v1478 = vunpack.c.l.b16 %v1411
    %v1479 = vunpack.c.h.b16 %v1411
    %v1480 = vunpack.c.l.b16 %v1412
    %v1481 = vunpack.c.h.b16 %v1412
    %v1482 = vunpack.c.l.b16 %v1413
    %v1483 = vunpack.c.h.b16 %v1413
    %v1484 = vunpack.c.l.b16 %v1414
    %v1485 = vunpack.c.h.b16 %v1414
    %v1486 = vunpack.c.l.b16 %v1415
    %v1487 = vunpack.c.h.b16 %v1415
    %v1488 = vpack.c.b16 %v1474, %v1472
    %v1489 = vpack.c.b16 %v1475, %v1473
    %v1490 = vpack.c.b16 %v1478, %v1476
    %v1491 = vpack.c.b16 %v1479, %v1477
    %v1492 = vpack.c.b16 %v1482, %v1480
    %v1493 = vpack.c.b16 %v1483, %v1481
    %v1494 = vpack.c.b16 %v1486, %v1484
    %v1495 = vpack.c.b16 %v1487, %v1485
    %vm1500 = vcmask 523264
    %v1502 = vsel %vm1500, %v1489, 0
    %v1505 = vsel %vm1500, %v1491, 0
    %v1508 = vsel %vm1500, %v1493, 0
    %v1511 = vsel %vm1500, %v1495, 0
    %1513 = vmatpush.bf16.msra.mxu0 %v1403
    %1514 = vmatpush.bf16.msra.mxu0 %v1402
    %1515 = vmatpush.bf16.msra.mxu0 %v1401
    %1516 = vmatpush.bf16.msra.mxu0 %v1400
    %1517 = vmatpush.bf16.msra.mxu0 %v1399
    %1518 = vmatpush.bf16.msra.mxu0 %v1398
    %1519 = vmatpush.bf16.msra.mxu0 %v1397
    %1520 = vmatpush.bf16.msra.mxu0 %v1396
    %1521 = vmatmul.bf16.gmra.mxu0 %v1488
    %v1522 = vpop.f32.mrf.mxu0
    %v1523 = vadd.f32 %v1427, %v1522
    %v1524 = vpop.f32.mrf.mxu0
    %v1525 = vadd.f32 %v1432, %v1524
    %1526 = vmatmul.bf16.gmra.mxu0 %v1490
    %v1527 = vpop.f32.mrf.mxu0
    %v1528 = vadd.f32 %v1437, %v1527
    %v1529 = vpop.f32.mrf.mxu0
    %v1530 = vadd.f32 %v1442, %v1529
    %1531 = vmatmul.bf16.gmra.mxu0 %v1492
    %v1532 = vpop.f32.mrf.mxu0
    %v1533 = vadd.f32 %v1447, %v1532
    %v1534 = vpop.f32.mrf.mxu0
    %v1535 = vadd.f32 %v1452, %v1534
    %1536 = vmatmul.bf16.gmra.mxu0 %v1494
    %v1537 = vpop.f32.mrf.mxu0
    %v1538 = vadd.f32 %v1457, %v1537
    %v1539 = vpop.f32.mrf.mxu0
    %v1540 = vadd.f32 %v1462, %v1539
    %1541 = vdwg.mxu0
    %1542 = vmatpush.bf16.msra.mxu0 0
    %1543 = vmatpush.bf16.msra.mxu0 0
    %1544 = vmatpush.bf16.msra.mxu0 0
    %1545 = vmatpush.bf16.msra.mxu0 0
    %1546 = vmatpush.bf16.msra.mxu0 %v1407
    %1547 = vmatpush.bf16.msra.mxu0 %v1406
    %1548 = vmatpush.bf16.msra.mxu0 %v1405
    %1549 = vmatpush.bf16.msra.mxu0 %v1404
    %1550 = vmatmul.bf16.gmra.mxu0 %v1502
    %v1551 = vpop.f32.mrf.mxu0
    %v1552 = vadd.f32 %v1523, %v1551
    %v1553 = vpop.f32.mrf.mxu0
    %v1554 = vadd.f32 %v1525, %v1553
    %1555 = vmatmul.bf16.gmra.mxu0 %v1505
    %v1556 = vpop.f32.mrf.mxu0
    %v1557 = vadd.f32 %v1528, %v1556
    %v1558 = vpop.f32.mrf.mxu0
    %v1559 = vadd.f32 %v1530, %v1558
    %1560 = vmatmul.bf16.gmra.mxu0 %v1508
    %v1561 = vpop.f32.mrf.mxu0
    %v1562 = vadd.f32 %v1533, %v1561
    %v1563 = vpop.f32.mrf.mxu0
    %v1564 = vadd.f32 %v1535, %v1563
    %1565 = vmatmul.bf16.gmra.mxu0 %v1511
    %v1566 = vpop.f32.mrf.mxu0
    %v1567 = vadd.f32 %v1538, %v1566
    %v1568 = vpop.f32.mrf.mxu0
    %v1569 = vadd.f32 %v1540, %v1568
    %1570 = vdwg.mxu0
    %v1571 = vmax.f32 %v1552, 0.0
    %v1572 = vmax.f32 %v1554, 0.0
    %v1573 = vmax.f32 %v1557, 0.0
    %v1574 = vmax.f32 %v1559, 0.0
    %v1575 = vmax.f32 %v1562, 0.0
    %v1576 = vmax.f32 %v1564, 0.0
    %v1577 = vmax.f32 %v1567, 0.0
    %v1578 = vmax.f32 %v1569, 0.0
    %v1579 = vld [vmem:[%s4] sm:$0xff]
    %v1580 = vld [vmem:[%s4 + $0x8] sm:$0xff]
    %v1581 = vld [vmem:[%s4 + $0x10] sm:$0xff]
    %v1582 = vld [vmem:[%s4 + $0x18] sm:$0xff]
    %v1583 = vld [vmem:[%s4 + $0x20] sm:$0xff]
    %v1584 = vld [vmem:[%s4 + $0x28] sm:$0xff]
    %v1585 = vld [vmem:[%s4 + $0x30] sm:$0xff]
    %v1586 = vld [vmem:[%s4 + $0x38] sm:$0xff]
    %1588 = vset.pattern.permute.xlu0 0
    %1589 = vperm.xlu0 %1588, %v1579
    %v1590 = vpop.permute.xlu0 %1589
    %1593 = vset.pattern.permute.xlu0 0
    %1594 = vperm.xlu0 %1593, %v1580
    %v1595 = vpop.permute.xlu0 %1594
    %1598 = vset.pattern.permute.xlu0 0
    %1599 = vperm.xlu0 %1598, %v1581
    %v1600 = vpop.permute.xlu0 %1599
    %1603 = vset.pattern.permute.xlu0 0
    %1604 = vperm.xlu0 %1603, %v1582
    %v1605 = vpop.permute.xlu0 %1604
    %1608 = vset.pattern.permute.xlu0 0
    %1609 = vperm.xlu0 %1608, %v1583
    %v1610 = vpop.permute.xlu0 %1609
    %1613 = vset.pattern.permute.xlu0 0
    %1614 = vperm.xlu0 %1613, %v1584
    %v1615 = vpop.permute.xlu0 %1614
    %1618 = vset.pattern.permute.xlu0 0
    %1619 = vperm.xlu0 %1618, %v1585
    %v1620 = vpop.permute.xlu0 %1619
    %1623 = vset.pattern.permute.xlu0 0
    %1624 = vperm.xlu0 %1623, %v1586
    %v1625 = vpop.permute.xlu0 %1624
    %v1627 = vmul.f32 %v1571, %v1590
    %v1628 = vmul.f32 %v1572, %v1595
    %v1629 = vmul.f32 %v1573, %v1600
    %v1630 = vmul.f32 %v1574, %v1605
    %v1631 = vmul.f32 %v1575, %v1610
    %v1632 = vmul.f32 %v1576, %v1615
    %v1633 = vmul.f32 %v1577, %v1620
    %v1634 = vmul.f32 %v1578, %v1625
    %v1635 = vadd.f32 %v1627, %v1628
    %v1636 = vadd.f32 %v1635, %v1629
    %v1637 = vadd.f32 %v1636, %v1630
    %v1638 = vadd.f32 %v1637, %v1631
    %v1639 = vadd.f32 %v1638, %v1632
    %v1640 = vadd.f32 %v1639, %v1633
    %v1641 = vadd.f32 %v1640, %v1634
    %v1642 = vrot.slane %v1641, 4
    %v1643 = vadd.f32 %v1641, %v1642
    %v1644 = vrot.slane %v1643, 2
    %v1645 = vadd.f32 %v1643, %v1644
    %v1646 = vrot.slane %v1645, 1
    %v1647 = vadd.f32 %v1645, %v1646
    %v1648 = vld [vmem:[#allocation2] sm:$0x1]
    %1650 = vset.pattern.permute.xlu0 0
    %1651 = vperm.xlu0 %1650, %v1648
    %v1652 = vpop.permute.xlu0 %1651
    %v1654 = vperm.slane %v1652, 0
    %v1655 = vadd.f32 %v1647, %v1654
    %1656 = vst [vmem:[#allocation3] sm:$0x1] %v1655
    // Predicated region
    $region38: #{tpu_custom_call.1} parent=1 // pred_check
      _
    $region39: #{tpu_custom_call.1} parent=1 // pred_check_branch
      %1658 = sbr.rel (0) target = $region41
    $region40: #{tpu_custom_call.1} parent=1 // pred_region
      %1660 = vsyncadd [#allocation4], 0
      %s1662 = sshll.u32 [#allocation3], 4
      %s1663 = int_to_ptr.vmem [resolvable:$true] %s1662
      %s1664 = sshll.u32 %s9, 4
      %s1665 = int_to_ptr.hbm [resolvable:$true] %s1664
      %1667 = dma.vmem_to_hbm [thread:$0]  %s1663, 16, %s1665, [#allocation4]
    $region41: #{tpu_custom_call.1} parent=1 // pred_fallthru
      _
    // Predicated region
    $region42: #{tpu_custom_call.1} parent=1 // pred_check
      _
    $region43: #{tpu_custom_call.1} parent=1 // pred_check_branch
      %1669 = sbr.rel (0) target = $region45
    $region44: #{tpu_custom_call.1} parent=1 // pred_region
      %1671 = dma.done [#allocation4], 16
    $region45: #{tpu_custom_call.1} parent=1 // pred_fallthru
      _
    %1672 = vsyncpa [#allocation4], 1

</llo_original>
